<compile_context>
chip_gen: v5e
topology: v5e:2x2
jax: 0.10.0
libtpu: 0.0.40
codegen_flags: <defaults>
</compile_context>

<pallas_src>
from functools import partial

import jax
import jax.numpy as jnp
from jax.experimental import pallas as pl
from jax.experimental.pallas import tpu as pltpu


# ----------------------------------------------------------------------------
# Kernel
# ----------------------------------------------------------------------------
def _attention_math(x_ref, wqkv_ref, wp_ref, bp_ref, qkv_scr, ctx_scr,
                    *, num_heads, mm_dtype):
    """Compute one batch element.

    x_ref    : (1, N, C)    activations for this grid step's batch element
    wqkv_ref : (C, 3C)      fused qkv weight, lane-dense, scale folded into q
    wp_ref   : (C, C)       output projection weight, lane-dense
    bp_ref   : (1, C)       output projection bias
    qkv_scr  : (N, 3C) f32  VMEM scratch holding the fused qkv activations
    ctx_scr  : (N, C)  f32  VMEM scratch used to head-concat attn@v along lanes

    Returns (out (N, C) f32, attn (H, N, N) f32).
    """
    H = num_heads
    _, N, C = x_ref.shape
    hd = C // H

    def mm(a, b):
        return jnp.dot(a.astype(mm_dtype), b.astype(mm_dtype),
                       preferred_element_type=jnp.float32)

    x2 = x_ref[0]                                                 # (N, C)

    # Fused QKV projection: one (N, C) x (C, 3C) matmul, full MXU lanes/depth.
    qkv_scr[...] = mm(x2, wqkv_ref[...])                          # (N, 3C) f32

    # Token-major -> head-major relayout: H cheap lane-window reads per tensor,
    # stacked along a new leading (head) dim.  All matmuls below are then
    # head-batched with leading batch dims (the Mosaic-native einsum forms).
    q = jnp.stack([qkv_scr[:, h * hd:(h + 1) * hd] for h in range(H)], axis=0)
    k = jnp.stack([qkv_scr[:, C + h * hd:C + (h + 1) * hd] for h in range(H)], axis=0)
    v = jnp.stack([qkv_scr[:, 2 * C + h * hd:2 * C + (h + 1) * hd] for h in range(H)], axis=0)

    # Scaled dot-product attention (scale already folded into the q weights).
    s = jnp.einsum('hnd,hmd->hnm', q.astype(mm_dtype), k.astype(mm_dtype),
                   preferred_element_type=jnp.float32)            # (H, N, N)
    s = s - jnp.max(s, axis=-1, keepdims=True)
    e = jnp.exp(s)
    attn = e / jnp.sum(e, axis=-1, keepdims=True)                 # exact softmax

    ctx = jnp.einsum('hnm,hmd->hnd', attn.astype(mm_dtype), v.astype(mm_dtype),
                     preferred_element_type=jnp.float32)          # (H, N, hd)

    # Head-concat along lanes via the VMEM scratch (equivalent to PyTorch's
    # transpose(1, 2).reshape(B, N, C)).
    for h in range(H):
        ctx_scr[:, h * hd:(h + 1) * hd] = ctx[h]

    # Fused output projection: head reduction inside the depth-C contraction.
    out = mm(ctx_scr[...], wp_ref[...]) + bp_ref[...]             # (N, C)
    return out, attn


def attention_kernel(x_ref, wqkv_ref, wp_ref, bp_ref, out_ref, attn_ref,
                     qkv_scr, ctx_scr, *, num_heads, mm_dtype):
    out, attn = _attention_math(x_ref, wqkv_ref, wp_ref, bp_ref, qkv_scr, ctx_scr,
                                num_heads=num_heads, mm_dtype=mm_dtype)
    N = x_ref.shape[1]
    out_ref[0] = out.astype(out_ref.dtype)
    # Lane-dense attention writeback: (H, N*N); at real ViT shapes N*N >> 128.
    attn_ref[0] = attn.reshape(num_heads, N * N)


def attention_kernel_no_attn(x_ref, wqkv_ref, wp_ref, bp_ref, out_ref,
                             qkv_scr, ctx_scr, *, num_heads, mm_dtype):
    out, _ = _attention_math(x_ref, wqkv_ref, wp_ref, bp_ref, qkv_scr, ctx_scr,
                             num_heads=num_heads, mm_dtype=mm_dtype)
    out_ref[0] = out.astype(out_ref.dtype)


# ----------------------------------------------------------------------------
# Wrapper
# ----------------------------------------------------------------------------
def _prep_params(wqkv, wp, bp, scale):
    """Lane-dense weight layout + scale folding.

    Pure layout work: under jit with constant weights it folds away; callers
    should ideally run it once per model rather than per forward.
    """
    C = wp.shape[0]
    wqkv_t = wqkv.T                                               # (C, 3C), cols = q|k|v
    wqkv_t = jnp.concatenate([wqkv_t[:, :C] * scale, wqkv_t[:, C:]], axis=1)
    return wqkv_t, wp.T, bp.reshape(1, C)


def attention_forward(x, wqkv, wp, bp, num_heads, scale, *,
                      return_attn=True, use_bf16_matmul=False):
    """x: (B, N, C); wqkv: (3C, C); wp: (C, C); bp: (C,).  Returns (out, attn)."""
    B, N, C = x.shape
    H = num_heads
    wqkv_t, wp_t, bp2 = _prep_params(wqkv, wp, bp, scale)
    mm_dtype = jnp.bfloat16 if use_bf16_matmul else jnp.float32

    # One batch element per grid step: weights stay resident (index_map -> 0),
    # x / out / attn stream per step so their DMA overlaps compute.
    grid = (B,)
    x_spec = pl.BlockSpec((1, N, C), lambda i: (i, 0, 0))
    w_specs = [
        pl.BlockSpec((C, 3 * C), lambda i: (0, 0)),
        pl.BlockSpec((C, C), lambda i: (0, 0)),
        pl.BlockSpec((1, C), lambda i: (0, 0)),
    ]
    out_spec = pl.BlockSpec((1, N, C), lambda i: (i, 0, 0))
    scratch = [pltpu.VMEM((N, 3 * C), jnp.float32),
               pltpu.VMEM((N, C), jnp.float32)]
    cparams = pltpu.CompilerParams(
        dimension_semantics=("parallel",),
        # Explicit scoped-VMEM budget (raises v5e's 16 MiB default; safe on
        # v6e/v7x).  Re-derive together with the batch block at real shapes.
        vmem_limit_bytes=32 * 1024 * 1024,
    )

    if return_attn:
        attn_spec = pl.BlockSpec((1, H, N * N), lambda i: (i, 0, 0))
        out, attn = pl.pallas_call(
            partial(attention_kernel, num_heads=H, mm_dtype=mm_dtype),
            out_shape=(
                jax.ShapeDtypeStruct((B, N, C), x.dtype),
                jax.ShapeDtypeStruct((B, H, N * N), jnp.float32),
            ),
            grid=grid,
            in_specs=[x_spec] + w_specs,
            out_specs=(out_spec, attn_spec),
            scratch_shapes=scratch,
            compiler_params=cparams,
        )(x, wqkv_t, wp_t, bp2)
        return out, attn.reshape(B, H, N, N)

    out = pl.pallas_call(
        partial(attention_kernel_no_attn, num_heads=H, mm_dtype=mm_dtype),
        out_shape=jax.ShapeDtypeStruct((B, N, C), x.dtype),
        grid=grid,
        in_specs=[x_spec] + w_specs,
        out_specs=out_spec,
        scratch_shapes=scratch,
        compiler_params=cparams,
    )(x, wqkv_t, wp_t, bp2)
    return out, None


# ----------------------------------------------------------------------------
# Pure-JAX reference (mirrors the PyTorch forward exactly)
# ----------------------------------------------------------------------------
def ref_attention(x, wqkv, wp, bp, num_heads, scale):
    B, N, C = x.shape
    hd = C // num_heads
    qkv = jnp.einsum('bnc,dc->bnd', x, wqkv, precision='highest')  # (B, N, 3C)
    qkv = qkv.reshape(B, N, 3, num_heads, hd).transpose(2, 0, 3, 1, 4)
    q, k, v = qkv[0], qkv[1], qkv[2]                               # (B, H, N, hd)
    attn = jnp.einsum('bhnd,bhmd->bhnm', q, k, precision='highest') * scale
    attn = jax.nn.softmax(attn, axis=-1)
    out = jnp.einsum('bhnm,bhmd->bhnd', attn, v, precision='highest')
    out = out.transpose(0, 2, 1, 3).reshape(B, N, C)
    out = jnp.einsum('bnc,dc->bnd', out, wp, precision='highest') + bp
    return out, attn


if __name__ == "__main__":
    # Module config (small, consistent with the forward's (B, N, C) input)
    B, N, C = 2, 8, 32
    num_heads = 8
    head_dim = C // num_heads
    scale = head_dim ** (-0.5)

    key = jax.random.PRNGKey(0)
    kx, kq, kp, kb = jax.random.split(key, 4)

    x = jax.random.normal(kx, (B, N, C), dtype=jnp.float32)
    # PyTorch Linear parameter shapes (qkv_bias=False):
    wqkv = 0.05 * jax.random.normal(kq, (3 * C, C), dtype=jnp.float32)
    wp = 0.05 * jax.random.normal(kp, (C, C), dtype=jnp.float32)
    bp = 0.05 * jax.random.normal(kb, (C,), dtype=jnp.float32)

    out, attn = attention_forward(x, wqkv, wp, bp, num_heads, scale)
    out = jax.block_until_ready(out)
    attn = jax.block_until_ready(attn)

    out_ref, attn_ref = ref_attention(x, wqkv, wp, bp, num_heads, scale)

    assert out.shape == (B, N, C) and attn.shape == (B, num_heads, N, N)
    assert jnp.allclose(out, out_ref, atol=2e-3, rtol=2e-3)
    assert jnp.allclose(attn, attn_ref, atol=2e-3, rtol=2e-3)
    # Exact softmax: every attention row sums to 1 (no approx reciprocal).
    assert jnp.allclose(attn.sum(-1), 1.0, atol=1e-5)

    # Variant without the attention-weights writeback (visualization off).
    out_na, attn_na = attention_forward(x, wqkv, wp, bp, num_heads, scale,
                                        return_attn=False)
    out_na = jax.block_until_ready(out_na)
    assert attn_na is None
    assert jnp.allclose(out_na, out_ref, atol=2e-3, rtol=2e-3)

    # bf16 MXU-operand variant (what real ViT shapes should use).
    out_bf, attn_bf = attention_forward(x, wqkv, wp, bp, num_heads, scale,
                                        use_bf16_matmul=True)
    out_bf = jax.block_until_ready(out_bf)
    assert jnp.allclose(out_bf, out_ref, atol=5e-2, rtol=5e-2)
    assert jnp.allclose(attn_bf, attn_ref, atol=5e-2, rtol=5e-2)

    print("KERNEL_OK")
</pallas_src>

<mosaic_0001>
module attributes {stable_mosaic.version = 11 : i64} {
  func.func @attention_kernel(%arg0: i32, %arg1: memref<1x8x32xf32, #tpu.memory_space<vmem>>, %arg2: memref<32x96xf32, #tpu.memory_space<vmem>>, %arg3: memref<32x32xf32, #tpu.memory_space<vmem>>, %arg4: memref<1x32xf32, #tpu.memory_space<vmem>>, %arg5: memref<1x8x32xf32, #tpu.memory_space<vmem>>, %arg6: memref<1x8x64xf32, #tpu.memory_space<vmem>>, %arg7: memref<8x96xf32, #tpu.memory_space<vmem>>, %arg8: memref<8x32xf32, #tpu.memory_space<vmem>>) attributes {dimension_semantics = [#tpu.dimension_semantics<parallel>], iteration_bounds = array<i64: 2>, scalar_prefetch = 0 : i64, scratch_operands = 2 : i64, tpu.core_type = #tpu.core_type<tc>, window_params = [{transform_indices = @transform_0, window_bounds = array<i64: 1, 8, 32>}, {pipeline_mode = #tpu.pipeline_mode<synchronous>, transform_indices = @transform_1, window_bounds = array<i64: 32, 96>}, {pipeline_mode = #tpu.pipeline_mode<synchronous>, transform_indices = @transform_2, window_bounds = array<i64: 32, 32>}, {pipeline_mode = #tpu.pipeline_mode<synchronous>, transform_indices = @transform_3, window_bounds = array<i64: 1, 32>}, {transform_indices = @transform_4, window_bounds = array<i64: 1, 8, 32>}, {transform_indices = @transform_5, window_bounds = array<i64: 1, 8, 64>}]} {
    %c0 = arith.constant 0 : index
    %c0_0 = arith.constant 0 : index
    %c0_1 = arith.constant 0 : index
    %0 = vector.load %arg1[%c0, %c0_0, %c0_1] : memref<1x8x32xf32, #tpu.memory_space<vmem>>, vector<1x8x32xf32>
    %1 = vector.shape_cast %0 : vector<1x8x32xf32> to vector<8x32xf32>
    %c0_2 = arith.constant 0 : index
    %c0_3 = arith.constant 0 : index
    %2 = vector.load %arg2[%c0_2, %c0_3] : memref<32x96xf32, #tpu.memory_space<vmem>>, vector<32x96xf32>
    %cst = arith.constant dense<0.000000e+00> : vector<8x96xf32>
    %3 = tpu.matmul %1, %2, %cst {dimension_numbers = #tpu.dot_dimension_numbers<[1], [0], [0], [1], [0, 0, 1, 1], [], []>} : vector<8x32xf32>, vector<32x96xf32>, vector<8x96xf32> -> vector<8x96xf32>
    %c0_4 = arith.constant 0 : index
    %c0_5 = arith.constant 0 : index
    %4 = vector.load %arg7[%c0_4, %c0_5] : memref<8x96xf32, #tpu.memory_space<vmem>>, vector<8x96xf32>
    tpu.vector_store %arg7[%c0_4, %c0_5], %3 {strides = array<i32>} : memref<8x96xf32, #tpu.memory_space<vmem>>, vector<8x96xf32>,
    %c0_6 = arith.constant 0 : index
    %c0_7 = arith.constant 0 : index
    %5 = vector.load %arg7[%c0_6, %c0_7] : memref<8x96xf32, #tpu.memory_space<vmem>>, vector<8x4xf32>
    %c0_8 = arith.constant 0 : index
    %c4 = arith.constant 4 : index
    %6 = vector.load %arg7[%c0_8, %c4] : memref<8x96xf32, #tpu.memory_space<vmem>>, vector<8x4xf32>
    %c0_9 = arith.constant 0 : index
    %c8 = arith.constant 8 : index
    %7 = vector.load %arg7[%c0_9, %c8] : memref<8x96xf32, #tpu.memory_space<vmem>>, vector<8x4xf32>
    %c0_10 = arith.constant 0 : index
    %c12 = arith.constant 12 : index
    %8 = vector.load %arg7[%c0_10, %c12] : memref<8x96xf32, #tpu.memory_space<vmem>>, vector<8x4xf32>
    %c0_11 = arith.constant 0 : index
    %c16 = arith.constant 16 : index
    %9 = vector.load %arg7[%c0_11, %c16] : memref<8x96xf32, #tpu.memory_space<vmem>>, vector<8x4xf32>
    %c0_12 = arith.constant 0 : index
    %c20 = arith.constant 20 : index
    %10 = vector.load %arg7[%c0_12, %c20] : memref<8x96xf32, #tpu.memory_space<vmem>>, vector<8x4xf32>
    %c0_13 = arith.constant 0 : index
    %c24 = arith.constant 24 : index
    %11 = vector.load %arg7[%c0_13, %c24] : memref<8x96xf32, #tpu.memory_space<vmem>>, vector<8x4xf32>
    %c0_14 = arith.constant 0 : index
    %c28 = arith.constant 28 : index
    %12 = vector.load %arg7[%c0_14, %c28] : memref<8x96xf32, #tpu.memory_space<vmem>>, vector<8x4xf32>
    %13 = vector.shape_cast %5 : vector<8x4xf32> to vector<1x8x4xf32>
    %14 = vector.shape_cast %6 : vector<8x4xf32> to vector<1x8x4xf32>
    %15 = vector.shape_cast %7 : vector<8x4xf32> to vector<1x8x4xf32>
    %16 = vector.shape_cast %8 : vector<8x4xf32> to vector<1x8x4xf32>
    %17 = vector.shape_cast %9 : vector<8x4xf32> to vector<1x8x4xf32>
    %18 = vector.shape_cast %10 : vector<8x4xf32> to vector<1x8x4xf32>
    %19 = vector.shape_cast %11 : vector<8x4xf32> to vector<1x8x4xf32>
    %20 = vector.shape_cast %12 : vector<8x4xf32> to vector<1x8x4xf32>
    %21 = tpu.concatenate %13, %14, %15, %16, %17, %18, %19, %20 in 0 : vector<1x8x4xf32>, vector<1x8x4xf32>, vector<1x8x4xf32>, vector<1x8x4xf32>, vector<1x8x4xf32>, vector<1x8x4xf32>, vector<1x8x4xf32>, vector<1x8x4xf32> -> vector<8x8x4xf32>
    %c0_15 = arith.constant 0 : index
    %c32 = arith.constant 32 : index
    %22 = vector.load %arg7[%c0_15, %c32] : memref<8x96xf32, #tpu.memory_space<vmem>>, vector<8x4xf32>
    %c0_16 = arith.constant 0 : index
    %c36 = arith.constant 36 : index
    %23 = vector.load %arg7[%c0_16, %c36] : memref<8x96xf32, #tpu.memory_space<vmem>>, vector<8x4xf32>
    %c0_17 = arith.constant 0 : index
    %c40 = arith.constant 40 : index
    %24 = vector.load %arg7[%c0_17, %c40] : memref<8x96xf32, #tpu.memory_space<vmem>>, vector<8x4xf32>
    %c0_18 = arith.constant 0 : index
    %c44 = arith.constant 44 : index
    %25 = vector.load %arg7[%c0_18, %c44] : memref<8x96xf32, #tpu.memory_space<vmem>>, vector<8x4xf32>
    %c0_19 = arith.constant 0 : index
    %c48 = arith.constant 48 : index
    %26 = vector.load %arg7[%c0_19, %c48] : memref<8x96xf32, #tpu.memory_space<vmem>>, vector<8x4xf32>
    %c0_20 = arith.constant 0 : index
    %c52 = arith.constant 52 : index
    %27 = vector.load %arg7[%c0_20, %c52] : memref<8x96xf32, #tpu.memory_space<vmem>>, vector<8x4xf32>
    %c0_21 = arith.constant 0 : index
    %c56 = arith.constant 56 : index
    %28 = vector.load %arg7[%c0_21, %c56] : memref<8x96xf32, #tpu.memory_space<vmem>>, vector<8x4xf32>
    %c0_22 = arith.constant 0 : index
    %c60 = arith.constant 60 : index
    %29 = vector.load %arg7[%c0_22, %c60] : memref<8x96xf32, #tpu.memory_space<vmem>>, vector<8x4xf32>
    %30 = vector.shape_cast %22 : vector<8x4xf32> to vector<1x8x4xf32>
    %31 = vector.shape_cast %23 : vector<8x4xf32> to vector<1x8x4xf32>
    %32 = vector.shape_cast %24 : vector<8x4xf32> to vector<1x8x4xf32>
    %33 = vector.shape_cast %25 : vector<8x4xf32> to vector<1x8x4xf32>
    %34 = vector.shape_cast %26 : vector<8x4xf32> to vector<1x8x4xf32>
    %35 = vector.shape_cast %27 : vector<8x4xf32> to vector<1x8x4xf32>
    %36 = vector.shape_cast %28 : vector<8x4xf32> to vector<1x8x4xf32>
    %37 = vector.shape_cast %29 : vector<8x4xf32> to vector<1x8x4xf32>
    %38 = tpu.concatenate %30, %31, %32, %33, %34, %35, %36, %37 in 0 : vector<1x8x4xf32>, vector<1x8x4xf32>, vector<1x8x4xf32>, vector<1x8x4xf32>, vector<1x8x4xf32>, vector<1x8x4xf32>, vector<1x8x4xf32>, vector<1x8x4xf32> -> vector<8x8x4xf32>
    %c0_23 = arith.constant 0 : index
    %c64 = arith.constant 64 : index
    %39 = vector.load %arg7[%c0_23, %c64] : memref<8x96xf32, #tpu.memory_space<vmem>>, vector<8x4xf32>
    %c0_24 = arith.constant 0 : index
    %c68 = arith.constant 68 : index
    %40 = vector.load %arg7[%c0_24, %c68] : memref<8x96xf32, #tpu.memory_space<vmem>>, vector<8x4xf32>
    %c0_25 = arith.constant 0 : index
    %c72 = arith.constant 72 : index
    %41 = vector.load %arg7[%c0_25, %c72] : memref<8x96xf32, #tpu.memory_space<vmem>>, vector<8x4xf32>
    %c0_26 = arith.constant 0 : index
    %c76 = arith.constant 76 : index
    %42 = vector.load %arg7[%c0_26, %c76] : memref<8x96xf32, #tpu.memory_space<vmem>>, vector<8x4xf32>
    %c0_27 = arith.constant 0 : index
    %c80 = arith.constant 80 : index
    %43 = vector.load %arg7[%c0_27, %c80] : memref<8x96xf32, #tpu.memory_space<vmem>>, vector<8x4xf32>
    %c0_28 = arith.constant 0 : index
    %c84 = arith.constant 84 : index
    %44 = vector.load %arg7[%c0_28, %c84] : memref<8x96xf32, #tpu.memory_space<vmem>>, vector<8x4xf32>
    %c0_29 = arith.constant 0 : index
    %c88 = arith.constant 88 : index
    %45 = vector.load %arg7[%c0_29, %c88] : memref<8x96xf32, #tpu.memory_space<vmem>>, vector<8x4xf32>
    %c0_30 = arith.constant 0 : index
    %c92 = arith.constant 92 : index
    %46 = vector.load %arg7[%c0_30, %c92] : memref<8x96xf32, #tpu.memory_space<vmem>>, vector<8x4xf32>
    %47 = vector.shape_cast %39 : vector<8x4xf32> to vector<1x8x4xf32>
    %48 = vector.shape_cast %40 : vector<8x4xf32> to vector<1x8x4xf32>
    %49 = vector.shape_cast %41 : vector<8x4xf32> to vector<1x8x4xf32>
    %50 = vector.shape_cast %42 : vector<8x4xf32> to vector<1x8x4xf32>
    %51 = vector.shape_cast %43 : vector<8x4xf32> to vector<1x8x4xf32>
    %52 = vector.shape_cast %44 : vector<8x4xf32> to vector<1x8x4xf32>
    %53 = vector.shape_cast %45 : vector<8x4xf32> to vector<1x8x4xf32>
    %54 = vector.shape_cast %46 : vector<8x4xf32> to vector<1x8x4xf32>
    %55 = tpu.concatenate %47, %48, %49, %50, %51, %52, %53, %54 in 0 : vector<1x8x4xf32>, vector<1x8x4xf32>, vector<1x8x4xf32>, vector<1x8x4xf32>, vector<1x8x4xf32>, vector<1x8x4xf32>, vector<1x8x4xf32>, vector<1x8x4xf32> -> vector<8x8x4xf32>
    "tpu.trace_start"() <{level = 10 : i32, message = "hnd,hmd->hnm"}> : () -> ()
    %cst_31 = arith.constant dense<0.000000e+00> : vector<8x8x8xf32>
    %56 = tpu.matmul %21, %38, %cst_31 {dimension_numbers = #tpu.dot_dimension_numbers<[2], [2], [1], [1], [0, 0, 0, 1, 1, 1], [0], [0]>} : vector<8x8x4xf32>, vector<8x8x4xf32>, vector<8x8x8xf32> -> vector<8x8x8xf32>
    "tpu.trace_stop"() : () -> ()
    %cst_32 = arith.constant dense<0xFF800000> : vector<8x8xf32>
    %57 = vector.multi_reduction <maximumf>, %56, %cst_32 [2] : vector<8x8x8xf32> to vector<8x8xf32>
    %58 = vector.shape_cast %57 : vector<8x8xf32> to vector<8x8x1xf32>
    %59 = vector.broadcast %58 : vector<8x8x1xf32> to vector<8x8x8xf32>
    %60 = arith.subf %56, %59 : vector<8x8x8xf32>
    %61 = math.exp %60 : vector<8x8x8xf32>
    %cst_33 = arith.constant dense<0.000000e+00> : vector<8x8xf32>
    %62 = vector.multi_reduction <add>, %61, %cst_33 [2] : vector<8x8x8xf32> to vector<8x8xf32>
    %63 = vector.shape_cast %62 : vector<8x8xf32> to vector<8x8x1xf32>
    %64 = vector.broadcast %63 : vector<8x8x1xf32> to vector<8x8x8xf32>
    %65 = arith.divf %61, %64 : vector<8x8x8xf32>
    "tpu.trace_start"() <{level = 10 : i32, message = "hnm,hmd->hnd"}> : () -> ()
    %cst_34 = arith.constant dense<0.000000e+00> : vector<8x8x4xf32>
    %66 = tpu.matmul %65, %55, %cst_34 {dimension_numbers = #tpu.dot_dimension_numbers<[2], [1], [1], [2], [0, 0, 0, 1, 1, 2], [0], [0]>} : vector<8x8x8xf32>, vector<8x8x4xf32>, vector<8x8x4xf32> -> vector<8x8x4xf32>
    "tpu.trace_stop"() : () -> ()
    %67 = vector.extract_strided_slice %66 {offsets = [0, 0, 0], sizes = [1, 8, 4], strides = [1, 1, 1]} : vector<8x8x4xf32> to vector<1x8x4xf32>
    %68 = vector.shape_cast %67 : vector<1x8x4xf32> to vector<8x4xf32>
    %c0_35 = arith.constant 0 : index
    %c0_36 = arith.constant 0 : index
    %69 = vector.load %arg8[%c0_35, %c0_36] : memref<8x32xf32, #tpu.memory_space<vmem>>, vector<8x4xf32>
    tpu.vector_store %arg8[%c0_35, %c0_36], %68 {strides = array<i32>} : memref<8x32xf32, #tpu.memory_space<vmem>>, vector<8x4xf32>,
    %70 = vector.extract_strided_slice %66 {offsets = [1, 0, 0], sizes = [1, 8, 4], strides = [1, 1, 1]} : vector<8x8x4xf32> to vector<1x8x4xf32>
    %71 = vector.shape_cast %70 : vector<1x8x4xf32> to vector<8x4xf32>
    %c0_37 = arith.constant 0 : index
    %c4_38 = arith.constant 4 : index
    %72 = vector.load %arg8[%c0_37, %c4_38] : memref<8x32xf32, #tpu.memory_space<vmem>>, vector<8x4xf32>
    tpu.vector_store %arg8[%c0_37, %c4_38], %71 {strides = array<i32>} : memref<8x32xf32, #tpu.memory_space<vmem>>, vector<8x4xf32>,
    %73 = vector.extract_strided_slice %66 {offsets = [2, 0, 0], sizes = [1, 8, 4], strides = [1, 1, 1]} : vector<8x8x4xf32> to vector<1x8x4xf32>
    %74 = vector.shape_cast %73 : vector<1x8x4xf32> to vector<8x4xf32>
    %c0_39 = arith.constant 0 : index
    %c8_40 = arith.constant 8 : index
    %75 = vector.load %arg8[%c0_39, %c8_40] : memref<8x32xf32, #tpu.memory_space<vmem>>, vector<8x4xf32>
    tpu.vector_store %arg8[%c0_39, %c8_40], %74 {strides = array<i32>} : memref<8x32xf32, #tpu.memory_space<vmem>>, vector<8x4xf32>,
    %76 = vector.extract_strided_slice %66 {offsets = [3, 0, 0], sizes = [1, 8, 4], strides = [1, 1, 1]} : vector<8x8x4xf32> to vector<1x8x4xf32>
    %77 = vector.shape_cast %76 : vector<1x8x4xf32> to vector<8x4xf32>
    %c0_41 = arith.constant 0 : index
    %c12_42 = arith.constant 12 : index
    %78 = vector.load %arg8[%c0_41, %c12_42] : memref<8x32xf32, #tpu.memory_space<vmem>>, vector<8x4xf32>
    tpu.vector_store %arg8[%c0_41, %c12_42], %77 {strides = array<i32>} : memref<8x32xf32, #tpu.memory_space<vmem>>, vector<8x4xf32>,
    %79 = vector.extract_strided_slice %66 {offsets = [4, 0, 0], sizes = [1, 8, 4], strides = [1, 1, 1]} : vector<8x8x4xf32> to vector<1x8x4xf32>
    %80 = vector.shape_cast %79 : vector<1x8x4xf32> to vector<8x4xf32>
    %c0_43 = arith.constant 0 : index
    %c16_44 = arith.constant 16 : index
    %81 = vector.load %arg8[%c0_43, %c16_44] : memref<8x32xf32, #tpu.memory_space<vmem>>, vector<8x4xf32>
    tpu.vector_store %arg8[%c0_43, %c16_44], %80 {strides = array<i32>} : memref<8x32xf32, #tpu.memory_space<vmem>>, vector<8x4xf32>,
    %82 = vector.extract_strided_slice %66 {offsets = [5, 0, 0], sizes = [1, 8, 4], strides = [1, 1, 1]} : vector<8x8x4xf32> to vector<1x8x4xf32>
    %83 = vector.shape_cast %82 : vector<1x8x4xf32> to vector<8x4xf32>
    %c0_45 = arith.constant 0 : index
    %c20_46 = arith.constant 20 : index
    %84 = vector.load %arg8[%c0_45, %c20_46] : memref<8x32xf32, #tpu.memory_space<vmem>>, vector<8x4xf32>
    tpu.vector_store %arg8[%c0_45, %c20_46], %83 {strides = array<i32>} : memref<8x32xf32, #tpu.memory_space<vmem>>, vector<8x4xf32>,
    %85 = vector.extract_strided_slice %66 {offsets = [6, 0, 0], sizes = [1, 8, 4], strides = [1, 1, 1]} : vector<8x8x4xf32> to vector<1x8x4xf32>
    %86 = vector.shape_cast %85 : vector<1x8x4xf32> to vector<8x4xf32>
    %c0_47 = arith.constant 0 : index
    %c24_48 = arith.constant 24 : index
    %87 = vector.load %arg8[%c0_47, %c24_48] : memref<8x32xf32, #tpu.memory_space<vmem>>, vector<8x4xf32>
    tpu.vector_store %arg8[%c0_47, %c24_48], %86 {strides = array<i32>} : memref<8x32xf32, #tpu.memory_space<vmem>>, vector<8x4xf32>,
    %88 = vector.extract_strided_slice %66 {offsets = [7, 0, 0], sizes = [1, 8, 4], strides = [1, 1, 1]} : vector<8x8x4xf32> to vector<1x8x4xf32>
    %89 = vector.shape_cast %88 : vector<1x8x4xf32> to vector<8x4xf32>
    %c0_49 = arith.constant 0 : index
    %c28_50 = arith.constant 28 : index
    %90 = vector.load %arg8[%c0_49, %c28_50] : memref<8x32xf32, #tpu.memory_space<vmem>>, vector<8x4xf32>
    tpu.vector_store %arg8[%c0_49, %c28_50], %89 {strides = array<i32>} : memref<8x32xf32, #tpu.memory_space<vmem>>, vector<8x4xf32>,
    %c0_51 = arith.constant 0 : index
    %c0_52 = arith.constant 0 : index
    %91 = vector.load %arg8[%c0_51, %c0_52] : memref<8x32xf32, #tpu.memory_space<vmem>>, vector<8x32xf32>
    %c0_53 = arith.constant 0 : index
    %c0_54 = arith.constant 0 : index
    %92 = vector.load %arg3[%c0_53, %c0_54] : memref<32x32xf32, #tpu.memory_space<vmem>>, vector<32x32xf32>
    %cst_55 = arith.constant dense<0.000000e+00> : vector<8x32xf32>
    %93 = tpu.matmul %91, %92, %cst_55 {dimension_numbers = #tpu.dot_dimension_numbers<[1], [0], [0], [1], [0, 0, 1, 1], [], []>} : vector<8x32xf32>, vector<32x32xf32>, vector<8x32xf32> -> vector<8x32xf32>
    %c0_56 = arith.constant 0 : index
    %c0_57 = arith.constant 0 : index
    %94 = vector.load %arg4[%c0_56, %c0_57] : memref<1x32xf32, #tpu.memory_space<vmem>>, vector<1x32xf32>
    %95 = vector.broadcast %94 : vector<1x32xf32> to vector<8x32xf32>
    %96 = arith.addf %93, %95 : vector<8x32xf32>
    %c0_58 = arith.constant 0 : index
    %c0_59 = arith.constant 0 : index
    %c0_60 = arith.constant 0 : index
    %97 = vector.load %arg5[%c0_58, %c0_59, %c0_60] : memref<1x8x32xf32, #tpu.memory_space<vmem>>, vector<1x8x32xf32>
    %98 = vector.shape_cast %97 : vector<1x8x32xf32> to vector<8x32xf32>
    %99 = vector.shape_cast %96 : vector<8x32xf32> to vector<1x8x32xf32>
    tpu.vector_store %arg5[%c0_58, %c0_59, %c0_60], %99 {strides = array<i32>} : memref<1x8x32xf32, #tpu.memory_space<vmem>>, vector<1x8x32xf32>,
    %100 = vector.shape_cast %65 : vector<8x8x8xf32> to vector<8x64xf32>
    %c0_61 = arith.constant 0 : index
    %c0_62 = arith.constant 0 : index
    %c0_63 = arith.constant 0 : index
    %101 = vector.load %arg6[%c0_61, %c0_62, %c0_63] : memref<1x8x64xf32, #tpu.memory_space<vmem>>, vector<1x8x64xf32>
    %102 = vector.shape_cast %101 : vector<1x8x64xf32> to vector<8x64xf32>
    %103 = vector.shape_cast %100 : vector<8x64xf32> to vector<1x8x64xf32>
    tpu.vector_store %arg6[%c0_61, %c0_62, %c0_63], %103 {strides = array<i32>} : memref<1x8x64xf32, #tpu.memory_space<vmem>>, vector<1x8x64xf32>,
    return
  }
  func.func @transform_0(%arg0: i32) -> (i32, i32, i32) {
    %c0_i32 = arith.constant 0 : i32
    %c0_i32_0 = arith.constant 0 : i32
    %c0_i32_1 = arith.constant 0 : i32
    return %arg0, %c0_i32, %c0_i32_0 : i32, i32, i32
  }
  func.func @transform_1(%arg0: i32) -> (i32, i32) {
    %c0_i32 = arith.constant 0 : i32
    %c0_i32_0 = arith.constant 0 : i32
    %c0_i32_1 = arith.constant 0 : i32
    return %c0_i32, %c0_i32_0 : i32, i32
  }
  func.func @transform_2(%arg0: i32) -> (i32, i32) {
    %c0_i32 = arith.constant 0 : i32
    %c0_i32_0 = arith.constant 0 : i32
    %c0_i32_1 = arith.constant 0 : i32
    return %c0_i32, %c0_i32_0 : i32, i32
  }
  func.func @transform_3(%arg0: i32) -> (i32, i32) {
    %c0_i32 = arith.constant 0 : i32
    %c0_i32_0 = arith.constant 0 : i32
    %c0_i32_1 = arith.constant 0 : i32
    return %c0_i32, %c0_i32_0 : i32, i32
  }
  func.func @transform_4(%arg0: i32) -> (i32, i32, i32) {
    %c0_i32 = arith.constant 0 : i32
    %c0_i32_0 = arith.constant 0 : i32
    %c0_i32_1 = arith.constant 0 : i32
    return %arg0, %c0_i32, %c0_i32_0 : i32, i32, i32
  }
  func.func @transform_5(%arg0: i32) -> (i32, i32, i32) {
    %c0_i32 = arith.constant 0 : i32
    %c0_i32_0 = arith.constant 0 : i32
    %c0_i32_1 = arith.constant 0 : i32
    return %arg0, %c0_i32, %c0_i32_0 : i32, i32, i32
  }
}

</mosaic_0001>

<llo_original>
// kernel: tpu_custom_call.1
$region0: #{tpu_custom_call.1}
  #allocation0 [shape = 'u32[]', space=smem, size = 0x4, offset = 0x4, fixed_abs, tag = 'smem constant byte address 0x4 - core index']
  #allocation1 [shape = 'u32[72,128]{1,0:T(1,128)}', space=vmem, size = 0x9000, scoped, tag = 'internal scratch']
  #allocation2 [shape = 'f32[8,96]{1,0:T(8,128)}', space=vmem, size = 0x1000, scoped, tag = 'scratch operand']
  #allocation3 [shape = 'f32[8,32]{1,0:T(8,128)}', space=vmem, size = 0x1000, scoped, tag = 'scratch operand']
  %s0 = inlined_call_operand.hbm [shape: f32[2,8,32], index: 0, kind: input, shape index: {}]
  %s1 = inlined_call_operand.hbm [shape: f32[32,96], index: 1, kind: input, shape index: {}]
  %s2 = inlined_call_operand.hbm [shape: f32[32,32], index: 2, kind: input, shape index: {}]
  %s3 = inlined_call_operand.vmem [shape: f32[1,32], index: 3, kind: input, shape index: {}]
  %s4 = inlined_call_operand.hbm [shape: f32[2,8,32], index: 4, kind: output, shape index: {0}]
  %s5 = inlined_call_operand.hbm [shape: f32[2,8,64], index: 5, kind: output, shape index: {1}]
  %6 = xla_tuple %s4, %s5
  %s7 = sld [smem:[#allocation0]]
  $region69: #{tpu_custom_call.1} parent=0
    _
  %s9 = ssub.s32 1, %s7
  %s10 = scalar_select 0, %s9, %s7
  $region1: #{tpu_custom_call.1} parent=0
    #allocation4 [shape = 'u8[8192]{0}', space=vmem, size = 0x2000, scoped, tag = 'input window, operand 0']
    #allocation5 [shape = 's32[2]{0}', space=sflag, size = 0x8, scoped, tag = 'scoped memory for tpu_custom_call.1']
    #allocation6 [shape = 's32[2]{0}', space=sflag, size = 0x8, scoped, tag = 'scoped memory for tpu_custom_call.1']
    #allocation7 [shape = 'u8[16384]{0}', space=vmem, size = 0x4000, scoped, tag = 'input window, operand 1, single buffered']
    #allocation8 [shape = 's32[1]{0}', space=sflag, size = 0x4, scoped, tag = 'scoped memory for tpu_custom_call.1']
    #allocation9 [shape = 'u8[16384]{0}', space=vmem, size = 0x4000, scoped, tag = 'input window, operand 2, single buffered']
    #allocation10 [shape = 'u8[8192]{0}', space=vmem, size = 0x2000, scoped, tag = 'output window, operand 0']
    #allocation11 [shape = 'u8[8192]{0}', space=vmem, size = 0x2000, scoped, tag = 'output window, operand 1']
    #allocation12 [shape = 's32[2]{0}', space=sflag, size = 0x8, scoped, tag = 'scoped memory for tpu_custom_call.1']
    %11 = vsyncpa [#allocation5], 0
    %s12 = scalar_lea.sflag [#allocation5], 1
    %13 = vsyncpa %s12, 0
    %14 = vsyncpa [#allocation8], 0
    %15 = vsyncpa [#allocation6], 0
    %s16 = scalar_lea.sflag [#allocation6], 1
    %17 = vsyncpa %s16, 0
    %18 = vsyncpa [#allocation12], 0
    %s19 = scalar_lea.sflag [#allocation12], 1
    %20 = vsyncpa %s19, 0
    loop: start=0, step=1, limit=4
    $region2: #{tpu_custom_call.1} parent=1 // loop_pre_header
      _
    $region3: #{tpu_custom_call.1} parent=1 // loop_header
      %s22 = sphi 0, %s26
      %p23 = scmp.ge.s32.totalorder %s22, 4
      %s32 = sphi 0, %s34
      %s35 = sphi 0, %s32
      %s36 = sphi 0, %s35
      %s52 = sphi 0, %s36
      %s56 = sphi 0, %s56
      %s58 = sphi 0, %s56
      %s59 = sphi 0, %s58
      %s73 = sphi 0, %s59
      %s77 = sphi 0, %s77
      %s79 = sphi 0, %s77
      %s80 = sphi 0, %s79
      %s94 = sphi 0, %s80
      %s98 = sphi 0, %s98
      %s100 = sphi 0, %s98
      %s101 = sphi 0, %s100
      %s115 = sphi 0, %s101
      %s121 = sphi 0, %s123
      %s124 = sphi 0, %s121
      %s125 = sphi 0, %s124
      %s141 = sphi 0, %s125
      %s147 = sphi 0, %s149
      %s150 = sphi 0, %s147
      %s151 = sphi 0, %s150
      %s167 = sphi 0, %s151
    $region4: #{tpu_custom_call.1} parent=1 // loop_header_branch
      %25 = sbr.rel (%p23) target = $region8
    $region5: #{tpu_custom_call.1} parent=1 // loop_body
      %s27 = ssub.s32 %s22, 1
      %s28 = ssub.s32 %s22, 2
      %s29 = sadd.s32 %s22, 1
      %s30 = ssub.s32 %s22, %s29
      %p31 = scmp.eq.s32.totalorder %s30, 0
      %s33 = sadd.s32 %s32, 1
      %s34 = scalar_select %p31, %s32, %s33
      %p37 = pneg %p31
      %p38 = scmp.eq.s32.totalorder %s22, 1
      %p39 = por %p37, %p38
      %p40 = scmp.ne.s32.totalorder %s32, %s35
      %p41 = scmp.eq.s32.totalorder %s22, 0
      %p42 = por %p40, %p41
      %p43 = scmp.ne.s32.totalorder %s32, %s35
      %p44 = scmp.eq.s32.totalorder %s27, 1
      %p45 = por %p43, %p44
      %p46 = scmp.ne.s32.totalorder %s35, %s36
      %p47 = scmp.eq.s32.totalorder %s27, 0
      %p48 = por %p46, %p47
      %p49 = scmp.ne.s32.totalorder %s35, %s36
      %p50 = scmp.eq.s32.totalorder %s28, 1
      %p51 = por %p49, %p50
      %p53 = scmp.ne.s32.totalorder %s36, %s52
      %p54 = scmp.eq.s32.totalorder %s28, 0
      %p55 = por %p53, %p54
      %s57 = sadd.s32 %s56, 1
      %p60 = scmp.eq.s32.totalorder %s22, 1
      %p61 = scmp.ne.s32.totalorder %s56, %s58
      %p62 = scmp.eq.s32.totalorder %s22, 0
      %p63 = por %p61, %p62
      %p64 = scmp.ne.s32.totalorder %s56, %s58
      %p65 = scmp.eq.s32.totalorder %s27, 1
      %p66 = por %p64, %p65
      %p67 = scmp.ne.s32.totalorder %s58, %s59
      %p68 = scmp.eq.s32.totalorder %s27, 0
      %p69 = por %p67, %p68
      %p70 = scmp.ne.s32.totalorder %s58, %s59
      %p71 = scmp.eq.s32.totalorder %s28, 1
      %p72 = por %p70, %p71
      %p74 = scmp.ne.s32.totalorder %s59, %s73
      %p75 = scmp.eq.s32.totalorder %s28, 0
      %p76 = por %p74, %p75
      %s78 = sadd.s32 %s77, 1
      %p81 = scmp.eq.s32.totalorder %s22, 1
      %p82 = scmp.ne.s32.totalorder %s77, %s79
      %p83 = scmp.eq.s32.totalorder %s22, 0
      %p84 = por %p82, %p83
      %p85 = scmp.ne.s32.totalorder %s77, %s79
      %p86 = scmp.eq.s32.totalorder %s27, 1
      %p87 = por %p85, %p86
      %p88 = scmp.ne.s32.totalorder %s79, %s80
      %p89 = scmp.eq.s32.totalorder %s27, 0
      %p90 = por %p88, %p89
      %p91 = scmp.ne.s32.totalorder %s79, %s80
      %p92 = scmp.eq.s32.totalorder %s28, 1
      %p93 = por %p91, %p92
      %p95 = scmp.ne.s32.totalorder %s80, %s94
      %p96 = scmp.eq.s32.totalorder %s28, 0
      %p97 = por %p95, %p96
      %s99 = sadd.s32 %s98, 1
      %p102 = scmp.eq.s32.totalorder %s22, 1
      %p103 = scmp.ne.s32.totalorder %s98, %s100
      %p104 = scmp.eq.s32.totalorder %s22, 0
      %p105 = por %p103, %p104
      %p106 = scmp.ne.s32.totalorder %s98, %s100
      %p107 = scmp.eq.s32.totalorder %s27, 1
      %p108 = por %p106, %p107
      %p109 = scmp.ne.s32.totalorder %s100, %s101
      %p110 = scmp.eq.s32.totalorder %s27, 0
      %p111 = por %p109, %p110
      %p112 = scmp.ne.s32.totalorder %s100, %s101
      %p113 = scmp.eq.s32.totalorder %s28, 1
      %p114 = por %p112, %p113
      %p116 = scmp.ne.s32.totalorder %s101, %s115
      %p117 = scmp.eq.s32.totalorder %s28, 0
      %p118 = por %p116, %p117
      %s119 = ssub.s32 %s22, %s29
      %p120 = scmp.eq.s32.totalorder %s119, 0
      %s122 = sadd.s32 %s121, 1
      %s123 = scalar_select %p120, %s121, %s122
      %p126 = pneg %p120
      %p127 = scmp.eq.s32.totalorder %s22, 1
      %p128 = por %p126, %p127
      %p129 = scmp.ne.s32.totalorder %s121, %s124
      %p130 = scmp.eq.s32.totalorder %s22, 0
      %p131 = por %p129, %p130
      %p132 = scmp.ne.s32.totalorder %s121, %s124
      %p133 = scmp.eq.s32.totalorder %s27, 1
      %p134 = por %p132, %p133
      %p135 = scmp.ne.s32.totalorder %s124, %s125
      %p136 = scmp.eq.s32.totalorder %s27, 0
      %p137 = por %p135, %p136
      %p138 = scmp.ne.s32.totalorder %s124, %s125
      %p139 = scmp.eq.s32.totalorder %s28, 1
      %p140 = por %p138, %p139
      %p142 = scmp.ne.s32.totalorder %s125, %s141
      %p143 = scmp.eq.s32.totalorder %s28, 0
      %p144 = por %p142, %p143
      %s145 = ssub.s32 %s22, %s29
      %p146 = scmp.eq.s32.totalorder %s145, 0
      %s148 = sadd.s32 %s147, 1
      %s149 = scalar_select %p146, %s147, %s148
      %p152 = pneg %p146
      %p153 = scmp.eq.s32.totalorder %s22, 1
      %p154 = por %p152, %p153
      %p155 = scmp.ne.s32.totalorder %s147, %s150
      %p156 = scmp.eq.s32.totalorder %s22, 0
      %p157 = por %p155, %p156
      %p158 = scmp.ne.s32.totalorder %s147, %s150
      %p159 = scmp.eq.s32.totalorder %s27, 1
      %p160 = por %p158, %p159
      %p161 = scmp.ne.s32.totalorder %s150, %s151
      %p162 = scmp.eq.s32.totalorder %s27, 0
      %p163 = por %p161, %p162
      %p164 = scmp.ne.s32.totalorder %s150, %s151
      %p165 = scmp.eq.s32.totalorder %s28, 1
      %p166 = por %p164, %p165
      %p168 = scmp.ne.s32.totalorder %s151, %s167
      %p169 = scmp.eq.s32.totalorder %s28, 0
      %p170 = por %p168, %p169
      %p171 = scmp.le.s32.totalorder 1, %s22
      %p172 = scmp.lt.s32.totalorder %s22, 3
      %p173 = pnand %p171, %p172
      %p174 = pneg %p173
      // Predicated region
      $region9: #{tpu_custom_call.1} parent=5 // pred_check
        _
      $region10: #{tpu_custom_call.1} parent=5 // pred_check_branch
        %176 = sbr.rel (%p173) target = $region12
      $region11: #{tpu_custom_call.1} parent=5 // pred_region
        %s177 = ssub.s32 %s22, 1
        // Predicated region
        $region13: #{tpu_custom_call.1} parent=11 // pred_check
          %p178 = pneg %p69
        $region14: #{tpu_custom_call.1} parent=11 // pred_check_branch
          %180 = sbr.rel (%p178) target = $region16
        $region15: #{tpu_custom_call.1} parent=11 // pred_region
          %182 = vsyncadd [#allocation8], 0
          %s183 = sshll.u32 %s1, 4
          %s184 = int_to_ptr.hbm [resolvable:$true] %s183
          %s185 = sshll.u32 [#allocation7], 4
          %s186 = int_to_ptr.vmem [resolvable:$true] %s185
          %191 = dma.hbm_to_vmem [thread:$0]  %s184, 512, %s186, [#allocation8], 128, 128, 8
        $region16: #{tpu_custom_call.1} parent=11 // pred_fallthru
          _
        // Predicated region
        $region17: #{tpu_custom_call.1} parent=11 // pred_check
          %p192 = pneg %p90
        $region18: #{tpu_custom_call.1} parent=11 // pred_check_branch
          %194 = sbr.rel (%p192) target = $region20
        $region19: #{tpu_custom_call.1} parent=11 // pred_region
          %196 = vsyncadd [#allocation8], 0
          %s197 = sshll.u32 %s2, 4
          %s198 = int_to_ptr.hbm [resolvable:$true] %s197
          %s199 = sshll.u32 [#allocation9], 4
          %s200 = int_to_ptr.vmem [resolvable:$true] %s199
          %205 = dma.hbm_to_vmem [thread:$0]  %s198, 512, %s200, [#allocation8], 128, 128, 8
        $region20: #{tpu_custom_call.1} parent=11 // pred_fallthru
          _
        // Predicated region
        $region21: #{tpu_custom_call.1} parent=11 // pred_check
          %p206 = pneg %p111
        $region22: #{tpu_custom_call.1} parent=11 // pred_check_branch
          %208 = sbr.rel (%p206) target = $region24
        $region23: #{tpu_custom_call.1} parent=11 // pred_region
          _
        $region24: #{tpu_custom_call.1} parent=11 // pred_fallthru
          _
      $region12: #{tpu_custom_call.1} parent=5 // pred_fallthru
        _
      %p209 = scmp.lt.s32.totalorder %s22, 2
      // Predicated region
      $region25: #{tpu_custom_call.1} parent=5 // pred_check
        %p210 = pneg %p209
      $region26: #{tpu_custom_call.1} parent=5 // pred_check_branch
        %212 = sbr.rel (%p210) target = $region28
      $region27: #{tpu_custom_call.1} parent=5 // pred_region
        // Predicated region
        $region29: #{tpu_custom_call.1} parent=27 // pred_check
          %p213 = pneg %p42
        $region30: #{tpu_custom_call.1} parent=27 // pred_check_branch
          %215 = sbr.rel (%p213) target = $region32
        $region31: #{tpu_custom_call.1} parent=27 // pred_region
          %s216 = sand.u32 %s32, 1
          %s217 = scalar_lea.sflag [#allocation5], %s216
          %s218 = sand.u32 %s32, 1
          %s219 = smul.addr %s218, 8
          %s220 = scalar_lea.vmem [#allocation4], %s219
          %222 = vsyncadd %s217, 0
          %s223 = smul.addr %s22, 8
          %s224 = scalar_lea.hbm %s0, %s223
          %s226 = sshll.u32 %s224, 4
          %s227 = int_to_ptr.hbm [resolvable:$true] %s226
          %s228 = sshll.u32 %s220, 4
          %s229 = int_to_ptr.vmem [resolvable:$true] %s228
          %231 = dma.hbm_to_vmem [thread:$0]  %s227, 128, %s229, %s217
        $region32: #{tpu_custom_call.1} parent=27 // pred_fallthru
          _
      $region28: #{tpu_custom_call.1} parent=5 // pred_fallthru
        _
      %p232 = scmp.le.s32.totalorder 1, %s22
      %p233 = scmp.lt.s32.totalorder %s22, 3
      %p234 = pnand %p232, %p233
      %p235 = pneg %p234
      // Predicated region
      $region33: #{tpu_custom_call.1} parent=5 // pred_check
        _
      $region34: #{tpu_custom_call.1} parent=5 // pred_check_branch
        %237 = sbr.rel (%p234) target = $region36
      $region35: #{tpu_custom_call.1} parent=5 // pred_region
        %s238 = ssub.s32 %s22, 1
        %s239 = sand.u32 %s35, 1
        %s240 = scalar_lea.sflag [#allocation5], %s239
        %s241 = sand.u32 %s35, 1
        %s242 = smul.addr %s241, 8
        %s243 = scalar_lea.vmem [#allocation4], %s242
        // Predicated region
        $region37: #{tpu_custom_call.1} parent=35 // pred_check
          %p244 = pneg %p48
        $region38: #{tpu_custom_call.1} parent=35 // pred_check_branch
          %246 = sbr.rel (%p244) target = $region40
        $region39: #{tpu_custom_call.1} parent=35 // pred_region
          %248 = dma.done %s240, 128
        $region40: #{tpu_custom_call.1} parent=35 // pred_fallthru
          _
        // Predicated region
        $region41: #{tpu_custom_call.1} parent=35 // pred_check
          %p249 = pneg %p69
        $region42: #{tpu_custom_call.1} parent=35 // pred_check_branch
          %251 = sbr.rel (%p249) target = $region44
        $region43: #{tpu_custom_call.1} parent=35 // pred_region
          %253 = dma.done [#allocation8], 512
        $region44: #{tpu_custom_call.1} parent=35 // pred_fallthru
          _
        // Predicated region
        $region45: #{tpu_custom_call.1} parent=35 // pred_check
          %p254 = pneg %p90
        $region46: #{tpu_custom_call.1} parent=35 // pred_check_branch
          %256 = sbr.rel (%p254) target = $region48
        $region47: #{tpu_custom_call.1} parent=35 // pred_region
          %258 = dma.done [#allocation8], 512
        $region48: #{tpu_custom_call.1} parent=35 // pred_fallthru
          _
        %s259 = sand.u32 %s35, 1
        %s260 = scalar_lea.sflag [#allocation5], %s259
        %s261 = sand.u32 %s35, 1
        %s262 = smul.addr %s261, 8
        %s263 = scalar_lea.vmem [#allocation4], %s262
        %p264 = pneg %p48
        %p265 = pneg %p45
        %p266 = pneg %p69
        %p267 = pneg %p66
        %p268 = pneg %p90
        %p269 = pneg %p87
        %p270 = pneg %p111
        %p271 = pneg %p108
        %p272 = pneg %p137
        %p273 = pneg %p134
        %s274 = sand.u32 %s124, 1
        %s275 = scalar_lea.sflag [#allocation6], %s274
        %s276 = sand.u32 %s124, 1
        %s277 = smul.addr %s276, 8
        %s278 = scalar_lea.vmem [#allocation10], %s277
        %p279 = pneg %p163
        %p280 = pneg %p160
        %s281 = sand.u32 %s150, 1
        %s282 = scalar_lea.sflag [#allocation12], %s281
        %s283 = sand.u32 %s150, 1
        %s284 = smul.addr %s283, 8
        %s285 = scalar_lea.vmem [#allocation11], %s284
        %v286 = vld [vmem:[%s243] sm:$0xff]
        %v287 = vld [vmem:[#allocation7] sm:$0xff]
        %v288 = vld [vmem:[#allocation7 + $0x8] sm:$0xff]
        %v289 = vld [vmem:[#allocation7 + $0x10] sm:$0xff]
        %v290 = vld [vmem:[#allocation7 + $0x18] sm:$0xff]
        %vm291 = vcmask 261120
        %v293 = vsel %vm291, %v286, 0
        %295 = vmatpush.msra.mxu0 0.0
        %296 = vmatpush.msra.mxu0 0.0
        %297 = vmatpush.msra.mxu0 0.0
        %298 = vmatpush.msra.mxu0 0.0
        %299 = vmatpush.msra.mxu0 0.0
        %300 = vmatpush.msra.mxu0 0.0
        %301 = vmatpush.msra.mxu0 0.0
        %302 = vmatpush.msra.mxu0 0.0
        %303 = vmatpush.msra.mxu0 0.0
        %304 = vmatpush.msra.mxu0 0.0
        %305 = vmatpush.msra.mxu0 0.0
        %306 = vmatpush.msra.mxu0 0.0
        %307 = vmatpush.msra.mxu0 %v290
        %308 = vmatpush.msra.mxu0 %v289
        %309 = vmatpush.msra.mxu0 %v288
        %310 = vmatpush.msra.mxu0 %v287
        %311 = vmatmul.f32.gmra.mxu0 %v293
        %v312 = vpop.f32.mrf.mxu0
        %v313 = vadd.f32 0.0, %v312
        %314 = vdwg.mxu0
        %vm315 = vcmask 785408
        %316 = vst.msk [vmem:[#allocation2] sm:$0xff] %vm315, %v313
        %v317 = vld [vmem:[#allocation2] sm:$0xff]
        %319 = vrot.lane.b32.xlu0 %v317, 124
        %v320 = vpop.permute.xlu0 %319
        %321 = vrot.lane.b32.xlu0 %v317, 120
        %v322 = vpop.permute.xlu0 %321
        %323 = vrot.lane.b32.xlu0 %v317, 116
        %v324 = vpop.permute.xlu0 %323
        %325 = vrot.lane.b32.xlu0 %v317, 112
        %v326 = vpop.permute.xlu0 %325
        %327 = vrot.lane.b32.xlu0 %v317, 108
        %v328 = vpop.permute.xlu0 %327
        %329 = vrot.lane.b32.xlu0 %v317, 104
        %v330 = vpop.permute.xlu0 %329
        %331 = vrot.lane.b32.xlu0 %v317, 100
        %v332 = vpop.permute.xlu0 %331
        %333 = vrot.lane.b32.xlu0 %v317, 96
        %v334 = vpop.permute.xlu0 %333
        %vm335 = vcmask 31744
        %v336 = vsel %vm335, %v317, 0
        %v338 = vsel %vm335, %v334, 0
        %340 = vmatpush.xpose.msra.mxu0 0.0
        %341 = vmatpush.xpose.msra.mxu0 0.0
        %342 = vmatpush.xpose.msra.mxu0 0.0
        %343 = vmatpush.xpose.msra.mxu0 0.0
        %344 = vmatpush.xpose.msra.mxu0 0.0
        %345 = vmatpush.xpose.msra.mxu0 0.0
        %346 = vmatpush.xpose.msra.mxu0 0.0
        %347 = vmatpush.xpose.msra.mxu0 0.0
        %348 = vmatpush.xpose.msra.mxu0 0.0
        %349 = vmatpush.xpose.msra.mxu0 0.0
        %350 = vmatpush.xpose.msra.mxu0 0.0
        %351 = vmatpush.xpose.msra.mxu0 0.0
        %352 = vmatpush.xpose.msra.mxu0 0.0
        %353 = vmatpush.xpose.msra.mxu0 0.0
        %354 = vmatpush.xpose.msra.mxu0 0.0
        %355 = vmatpush.xpose.msra.mxu0 %v338
        %356 = vmatmul.f32.gmra.mxu0 %v336
        %v357 = vpop.f32.mrf.mxu0
        %v358 = vadd.f32 0.0, %v357
        %359 = vdwg.mxu0
        %360 = vrot.lane.b32.xlu0 %v320, 96
        %v361 = vpop.permute.xlu0 %360
        %v362 = vsel %vm335, %v320, 0
        %v364 = vsel %vm335, %v361, 0
        %366 = vmatpush.xpose.msra.mxu0 0.0
        %367 = vmatpush.xpose.msra.mxu0 0.0
        %368 = vmatpush.xpose.msra.mxu0 0.0
        %369 = vmatpush.xpose.msra.mxu0 0.0
        %370 = vmatpush.xpose.msra.mxu0 0.0
        %371 = vmatpush.xpose.msra.mxu0 0.0
        %372 = vmatpush.xpose.msra.mxu0 0.0
        %373 = vmatpush.xpose.msra.mxu0 0.0
        %374 = vmatpush.xpose.msra.mxu0 0.0
        %375 = vmatpush.xpose.msra.mxu0 0.0
        %376 = vmatpush.xpose.msra.mxu0 0.0
        %377 = vmatpush.xpose.msra.mxu0 0.0
        %378 = vmatpush.xpose.msra.mxu0 0.0
        %379 = vmatpush.xpose.msra.mxu0 0.0
        %380 = vmatpush.xpose.msra.mxu0 0.0
        %381 = vmatpush.xpose.msra.mxu0 %v364
        %382 = vmatmul.f32.gmra.mxu0 %v362
        %v383 = vpop.f32.mrf.mxu0
        %v384 = vadd.f32 0.0, %v383
        %385 = vdwg.mxu0
        %386 = vrot.lane.b32.xlu0 %v322, 96
        %v387 = vpop.permute.xlu0 %386
        %v388 = vsel %vm335, %v322, 0
        %v390 = vsel %vm335, %v387, 0
        %392 = vmatpush.xpose.msra.mxu0 0.0
        %393 = vmatpush.xpose.msra.mxu0 0.0
        %394 = vmatpush.xpose.msra.mxu0 0.0
        %395 = vmatpush.xpose.msra.mxu0 0.0
        %396 = vmatpush.xpose.msra.mxu0 0.0
        %397 = vmatpush.xpose.msra.mxu0 0.0
        %398 = vmatpush.xpose.msra.mxu0 0.0
        %399 = vmatpush.xpose.msra.mxu0 0.0
        %400 = vmatpush.xpose.msra.mxu0 0.0
        %401 = vmatpush.xpose.msra.mxu0 0.0
        %402 = vmatpush.xpose.msra.mxu0 0.0
        %403 = vmatpush.xpose.msra.mxu0 0.0
        %404 = vmatpush.xpose.msra.mxu0 0.0
        %405 = vmatpush.xpose.msra.mxu0 0.0
        %406 = vmatpush.xpose.msra.mxu0 0.0
        %407 = vmatpush.xpose.msra.mxu0 %v390
        %408 = vmatmul.f32.gmra.mxu0 %v388
        %v409 = vpop.f32.mrf.mxu0
        %v410 = vadd.f32 0.0, %v409
        %411 = vdwg.mxu0
        %412 = vrot.lane.b32.xlu0 %v324, 96
        %v413 = vpop.permute.xlu0 %412
        %v414 = vsel %vm335, %v324, 0
        %v416 = vsel %vm335, %v413, 0
        %418 = vmatpush.xpose.msra.mxu0 0.0
        %419 = vmatpush.xpose.msra.mxu0 0.0
        %420 = vmatpush.xpose.msra.mxu0 0.0
        %421 = vmatpush.xpose.msra.mxu0 0.0
        %422 = vmatpush.xpose.msra.mxu0 0.0
        %423 = vmatpush.xpose.msra.mxu0 0.0
        %424 = vmatpush.xpose.msra.mxu0 0.0
        %425 = vmatpush.xpose.msra.mxu0 0.0
        %426 = vmatpush.xpose.msra.mxu0 0.0
        %427 = vmatpush.xpose.msra.mxu0 0.0
        %428 = vmatpush.xpose.msra.mxu0 0.0
        %429 = vmatpush.xpose.msra.mxu0 0.0
        %430 = vmatpush.xpose.msra.mxu0 0.0
        %431 = vmatpush.xpose.msra.mxu0 0.0
        %432 = vmatpush.xpose.msra.mxu0 0.0
        %433 = vmatpush.xpose.msra.mxu0 %v416
        %434 = vmatmul.f32.gmra.mxu0 %v414
        %v435 = vpop.f32.mrf.mxu0
        %v436 = vadd.f32 0.0, %v435
        %437 = vdwg.mxu0
        %438 = vrot.lane.b32.xlu0 %v326, 96
        %v439 = vpop.permute.xlu0 %438
        %v440 = vsel %vm335, %v326, 0
        %v442 = vsel %vm335, %v439, 0
        %444 = vmatpush.xpose.msra.mxu0 0.0
        %445 = vmatpush.xpose.msra.mxu0 0.0
        %446 = vmatpush.xpose.msra.mxu0 0.0
        %447 = vmatpush.xpose.msra.mxu0 0.0
        %448 = vmatpush.xpose.msra.mxu0 0.0
        %449 = vmatpush.xpose.msra.mxu0 0.0
        %450 = vmatpush.xpose.msra.mxu0 0.0
        %451 = vmatpush.xpose.msra.mxu0 0.0
        %452 = vmatpush.xpose.msra.mxu0 0.0
        %453 = vmatpush.xpose.msra.mxu0 0.0
        %454 = vmatpush.xpose.msra.mxu0 0.0
        %455 = vmatpush.xpose.msra.mxu0 0.0
        %456 = vmatpush.xpose.msra.mxu0 0.0
        %457 = vmatpush.xpose.msra.mxu0 0.0
        %458 = vmatpush.xpose.msra.mxu0 0.0
        %459 = vmatpush.xpose.msra.mxu0 %v442
        %460 = vmatmul.f32.gmra.mxu0 %v440
        %v461 = vpop.f32.mrf.mxu0
        %v462 = vadd.f32 0.0, %v461
        %463 = vdwg.mxu0
        %464 = vrot.lane.b32.xlu0 %v328, 96
        %v465 = vpop.permute.xlu0 %464
        %v466 = vsel %vm335, %v328, 0
        %v468 = vsel %vm335, %v465, 0
        %470 = vmatpush.xpose.msra.mxu0 0.0
        %471 = vmatpush.xpose.msra.mxu0 0.0
        %472 = vmatpush.xpose.msra.mxu0 0.0
        %473 = vmatpush.xpose.msra.mxu0 0.0
        %474 = vmatpush.xpose.msra.mxu0 0.0
        %475 = vmatpush.xpose.msra.mxu0 0.0
        %476 = vmatpush.xpose.msra.mxu0 0.0
        %477 = vmatpush.xpose.msra.mxu0 0.0
        %478 = vmatpush.xpose.msra.mxu0 0.0
        %479 = vmatpush.xpose.msra.mxu0 0.0
        %480 = vmatpush.xpose.msra.mxu0 0.0
        %481 = vmatpush.xpose.msra.mxu0 0.0
        %482 = vmatpush.xpose.msra.mxu0 0.0
        %483 = vmatpush.xpose.msra.mxu0 0.0
        %484 = vmatpush.xpose.msra.mxu0 0.0
        %485 = vmatpush.xpose.msra.mxu0 %v468
        %486 = vmatmul.f32.gmra.mxu0 %v466
        %v487 = vpop.f32.mrf.mxu0
        %v488 = vadd.f32 0.0, %v487
        %489 = vdwg.mxu0
        %490 = vrot.lane.b32.xlu0 %v330, 96
        %v491 = vpop.permute.xlu0 %490
        %v492 = vsel %vm335, %v330, 0
        %v494 = vsel %vm335, %v491, 0
        %496 = vmatpush.xpose.msra.mxu0 0.0
        %497 = vmatpush.xpose.msra.mxu0 0.0
        %498 = vmatpush.xpose.msra.mxu0 0.0
        %499 = vmatpush.xpose.msra.mxu0 0.0
        %500 = vmatpush.xpose.msra.mxu0 0.0
        %501 = vmatpush.xpose.msra.mxu0 0.0
        %502 = vmatpush.xpose.msra.mxu0 0.0
        %503 = vmatpush.xpose.msra.mxu0 0.0
        %504 = vmatpush.xpose.msra.mxu0 0.0
        %505 = vmatpush.xpose.msra.mxu0 0.0
        %506 = vmatpush.xpose.msra.mxu0 0.0
        %507 = vmatpush.xpose.msra.mxu0 0.0
        %508 = vmatpush.xpose.msra.mxu0 0.0
        %509 = vmatpush.xpose.msra.mxu0 0.0
        %510 = vmatpush.xpose.msra.mxu0 0.0
        %511 = vmatpush.xpose.msra.mxu0 %v494
        %512 = vmatmul.f32.gmra.mxu0 %v492
        %v513 = vpop.f32.mrf.mxu0
        %v514 = vadd.f32 0.0, %v513
        %515 = vdwg.mxu0
        %516 = vrot.lane.b32.xlu0 %v332, 96
        %v517 = vpop.permute.xlu0 %516
        %v518 = vsel %vm335, %v332, 0
        %v520 = vsel %vm335, %v517, 0
        %522 = vmatpush.xpose.msra.mxu0 0.0
        %523 = vmatpush.xpose.msra.mxu0 0.0
        %524 = vmatpush.xpose.msra.mxu0 0.0
        %525 = vmatpush.xpose.msra.mxu0 0.0
        %526 = vmatpush.xpose.msra.mxu0 0.0
        %527 = vmatpush.xpose.msra.mxu0 0.0
        %528 = vmatpush.xpose.msra.mxu0 0.0
        %529 = vmatpush.xpose.msra.mxu0 0.0
        %530 = vmatpush.xpose.msra.mxu0 0.0
        %531 = vmatpush.xpose.msra.mxu0 0.0
        %532 = vmatpush.xpose.msra.mxu0 0.0
        %533 = vmatpush.xpose.msra.mxu0 0.0
        %534 = vmatpush.xpose.msra.mxu0 0.0
        %535 = vmatpush.xpose.msra.mxu0 0.0
        %536 = vmatpush.xpose.msra.mxu0 0.0
        %537 = vmatpush.xpose.msra.mxu0 %v520
        %538 = vmatmul.f32.gmra.mxu0 %v518
        %v539 = vpop.f32.mrf.mxu0
        %v540 = vadd.f32 0.0, %v539
        %541 = vdwg.mxu0
        %vm542 = vcmask 64512
        %v543 = vsel %vm542, %v358, -inf
        %544 = vmax.xlane.f32.xlu0 %v543
        %v545 = vpop.xlane.xlu0 %544
        %v546 = vsel %vm542, %v384, -inf
        %547 = vmax.xlane.f32.xlu0 %v546
        %v548 = vpop.xlane.xlu0 %547
        %v549 = vsel %vm542, %v410, -inf
        %550 = vmax.xlane.f32.xlu0 %v549
        %v551 = vpop.xlane.xlu0 %550
        %v552 = vsel %vm542, %v436, -inf
        %553 = vmax.xlane.f32.xlu0 %v552
        %v554 = vpop.xlane.xlu0 %553
        %v555 = vsel %vm542, %v462, -inf
        %556 = vmax.xlane.f32.xlu0 %v555
        %v557 = vpop.xlane.xlu0 %556
        %v558 = vsel %vm542, %v488, -inf
        %559 = vmax.xlane.f32.xlu0 %v558
        %v560 = vpop.xlane.xlu0 %559
        %v561 = vsel %vm542, %v514, -inf
        %562 = vmax.xlane.f32.xlu0 %v561
        %v563 = vpop.xlane.xlu0 %562
        %v564 = vsel %vm542, %v540, -inf
        %565 = vmax.xlane.f32.xlu0 %v564
        %v566 = vpop.xlane.xlu0 %565
        %v567 = vsub.f32 %v358, %v545
        %v568 = vsub.f32 %v384, %v548
        %v569 = vsub.f32 %v410, %v551
        %v570 = vsub.f32 %v436, %v554
        %v571 = vsub.f32 %v462, %v557
        %v572 = vsub.f32 %v488, %v560
        %v573 = vsub.f32 %v514, %v563
        %v574 = vsub.f32 %v540, %v566
        %v575 = vmul.f32 %v567, 1.442695
        %v576 = vpow.pop %v575
        %v577 = vmul.f32 %v568, 1.442695
        %v578 = vpow.pop %v577
        %v579 = vmul.f32 %v569, 1.442695
        %v580 = vpow.pop %v579
        %v581 = vmul.f32 %v570, 1.442695
        %v582 = vpow.pop %v581
        %v583 = vmul.f32 %v571, 1.442695
        %v584 = vpow.pop %v583
        %v585 = vmul.f32 %v572, 1.442695
        %v586 = vpow.pop %v585
        %v587 = vmul.f32 %v573, 1.442695
        %v588 = vpow.pop %v587
        %v589 = vmul.f32 %v574, 1.442695
        %v590 = vpow.pop %v589
        %v591 = vsel %vm542, %v576, 0.0
        %592 = vadd.xlane.f32.xlu0 %v591
        %v593 = vpop.xlane.xlu0 %592
        %v594 = vsel %vm542, %v578, 0.0
        %595 = vadd.xlane.f32.xlu0 %v594
        %v596 = vpop.xlane.xlu0 %595
        %v597 = vsel %vm542, %v580, 0.0
        %598 = vadd.xlane.f32.xlu0 %v597
        %v599 = vpop.xlane.xlu0 %598
        %v600 = vsel %vm542, %v582, 0.0
        %601 = vadd.xlane.f32.xlu0 %v600
        %v602 = vpop.xlane.xlu0 %601
        %v603 = vsel %vm542, %v584, 0.0
        %604 = vadd.xlane.f32.xlu0 %v603
        %v605 = vpop.xlane.xlu0 %604
        %v606 = vsel %vm542, %v586, 0.0
        %607 = vadd.xlane.f32.xlu0 %v606
        %v608 = vpop.xlane.xlu0 %607
        %v609 = vsel %vm542, %v588, 0.0
        %610 = vadd.xlane.f32.xlu0 %v609
        %v611 = vpop.xlane.xlu0 %610
        %v612 = vsel %vm542, %v590, 0.0
        %613 = vadd.xlane.f32.xlu0 %v612
        %v614 = vpop.xlane.xlu0 %613
        %v615 = vrcp.pop %v593
        %v616 = vmul.f32 %v593, %v615
        %v617 = vsub.f32 1.0, %v616
        %v618 = vmul.f32 %v615, %v617
        %v619 = vadd.f32 %v615, %v618
        %vm620 = vweird.f32 %v593
        %vm621 = vweird.f32 %v615
        %vm622 = vmor %vm620, %vm621
        %v623 = vsel %vm622, %v615, %v619
        %v624 = vand.u32 2147483647, %v593
        %vm625 = vcmp.eq.f32.partialorder %v624, 8.507059e+37
        %v626 = vand.u32 %v593, 2147483648
        %v627 = vor.u32 1.1754944e-38, %v626
        %v628 = vsel %vm625, %v627, %v623
        %v629 = vmul.f32 %v576, %v628
        %v630 = vrcp.pop %v596
        %v631 = vmul.f32 %v596, %v630
        %v632 = vsub.f32 1.0, %v631
        %v633 = vmul.f32 %v630, %v632
        %v634 = vadd.f32 %v630, %v633
        %vm635 = vweird.f32 %v596
        %vm636 = vweird.f32 %v630
        %vm637 = vmor %vm635, %vm636
        %v638 = vsel %vm637, %v630, %v634
        %v639 = vand.u32 2147483647, %v596
        %vm640 = vcmp.eq.f32.partialorder %v639, 8.507059e+37
        %v641 = vand.u32 %v596, 2147483648
        %v642 = vor.u32 1.1754944e-38, %v641
        %v643 = vsel %vm640, %v642, %v638
        %v644 = vmul.f32 %v578, %v643
        %v645 = vrcp.pop %v599
        %v646 = vmul.f32 %v599, %v645
        %v647 = vsub.f32 1.0, %v646
        %v648 = vmul.f32 %v645, %v647
        %v649 = vadd.f32 %v645, %v648
        %vm650 = vweird.f32 %v599
        %vm651 = vweird.f32 %v645
        %vm652 = vmor %vm650, %vm651
        %v653 = vsel %vm652, %v645, %v649
        %v654 = vand.u32 2147483647, %v599
        %vm655 = vcmp.eq.f32.partialorder %v654, 8.507059e+37
        %v656 = vand.u32 %v599, 2147483648
        %v657 = vor.u32 1.1754944e-38, %v656
        %v658 = vsel %vm655, %v657, %v653
        %v659 = vmul.f32 %v580, %v658
        %v660 = vrcp.pop %v602
        %v661 = vmul.f32 %v602, %v660
        %v662 = vsub.f32 1.0, %v661
        %v663 = vmul.f32 %v660, %v662
        %v664 = vadd.f32 %v660, %v663
        %vm665 = vweird.f32 %v602
        %vm666 = vweird.f32 %v660
        %vm667 = vmor %vm665, %vm666
        %v668 = vsel %vm667, %v660, %v664
        %v669 = vand.u32 2147483647, %v602
        %vm670 = vcmp.eq.f32.partialorder %v669, 8.507059e+37
        %v671 = vand.u32 %v602, 2147483648
        %v672 = vor.u32 1.1754944e-38, %v671
        %v673 = vsel %vm670, %v672, %v668
        %v674 = vmul.f32 %v582, %v673
        %v675 = vrcp.pop %v605
        %v676 = vmul.f32 %v605, %v675
        %v677 = vsub.f32 1.0, %v676
        %v678 = vmul.f32 %v675, %v677
        %v679 = vadd.f32 %v675, %v678
        %vm680 = vweird.f32 %v605
        %vm681 = vweird.f32 %v675
        %vm682 = vmor %vm680, %vm681
        %v683 = vsel %vm682, %v675, %v679
        %v684 = vand.u32 2147483647, %v605
        %vm685 = vcmp.eq.f32.partialorder %v684, 8.507059e+37
        %v686 = vand.u32 %v605, 2147483648
        %v687 = vor.u32 1.1754944e-38, %v686
        %v688 = vsel %vm685, %v687, %v683
        %v689 = vmul.f32 %v584, %v688
        %v690 = vrcp.pop %v608
        %v691 = vmul.f32 %v608, %v690
        %v692 = vsub.f32 1.0, %v691
        %v693 = vmul.f32 %v690, %v692
        %v694 = vadd.f32 %v690, %v693
        %vm695 = vweird.f32 %v608
        %vm696 = vweird.f32 %v690
        %vm697 = vmor %vm695, %vm696
        %v698 = vsel %vm697, %v690, %v694
        %v699 = vand.u32 2147483647, %v608
        %vm700 = vcmp.eq.f32.partialorder %v699, 8.507059e+37
        %v701 = vand.u32 %v608, 2147483648
        %v702 = vor.u32 1.1754944e-38, %v701
        %v703 = vsel %vm700, %v702, %v698
        %v704 = vmul.f32 %v586, %v703
        %v705 = vrcp.pop %v611
        %v706 = vmul.f32 %v611, %v705
        %v707 = vsub.f32 1.0, %v706
        %v708 = vmul.f32 %v705, %v707
        %v709 = vadd.f32 %v705, %v708
        %vm710 = vweird.f32 %v611
        %vm711 = vweird.f32 %v705
        %vm712 = vmor %vm710, %vm711
        %v713 = vsel %vm712, %v705, %v709
        %v714 = vand.u32 2147483647, %v611
        %vm715 = vcmp.eq.f32.partialorder %v714, 8.507059e+37
        %v716 = vand.u32 %v611, 2147483648
        %v717 = vor.u32 1.1754944e-38, %v716
        %v718 = vsel %vm715, %v717, %v713
        %v719 = vmul.f32 %v588, %v718
        %v720 = vrcp.pop %v614
        %v721 = vmul.f32 %v614, %v720
        %v722 = vsub.f32 1.0, %v721
        %v723 = vmul.f32 %v720, %v722
        %v724 = vadd.f32 %v720, %v723
        %vm725 = vweird.f32 %v614
        %vm726 = vweird.f32 %v720
        %vm727 = vmor %vm725, %vm726
        %v728 = vsel %vm727, %v720, %v724
        %v729 = vand.u32 2147483647, %v614
        %vm730 = vcmp.eq.f32.partialorder %v729, 8.507059e+37
        %v731 = vand.u32 %v614, 2147483648
        %v732 = vor.u32 1.1754944e-38, %v731
        %v733 = vsel %vm730, %v732, %v728
        %v734 = vmul.f32 %v590, %v733
        %735 = vrot.lane.b32.xlu0 %v317, 64
        %v736 = vpop.permute.xlu0 %735
        %v739 = vsel %vm542, %v629, 0
        %741 = vmatpush.msra.mxu0 0.0
        %742 = vmatpush.msra.mxu0 0.0
        %743 = vmatpush.msra.mxu0 0.0
        %744 = vmatpush.msra.mxu0 0.0
        %745 = vmatpush.msra.mxu0 0.0
        %746 = vmatpush.msra.mxu0 0.0
        %747 = vmatpush.msra.mxu0 0.0
        %748 = vmatpush.msra.mxu0 0.0
        %749 = vmatpush.msra.mxu0 0.0
        %750 = vmatpush.msra.mxu0 0.0
        %751 = vmatpush.msra.mxu0 0.0
        %752 = vmatpush.msra.mxu0 0.0
        %753 = vmatpush.msra.mxu0 0.0
        %754 = vmatpush.msra.mxu0 0.0
        %755 = vmatpush.msra.mxu0 0.0
        %756 = vmatpush.msra.mxu0 %v736
        %757 = vmatmul.f32.gmra.mxu0 %v739
        %v758 = vpop.f32.mrf.mxu0
        %v759 = vadd.f32 0.0, %v758
        %760 = vdwg.mxu0
        %761 = vrot.lane.b32.xlu0 %v320, 64
        %v762 = vpop.permute.xlu0 %761
        %v765 = vsel %vm542, %v644, 0
        %767 = vmatpush.msra.mxu0 0.0
        %768 = vmatpush.msra.mxu0 0.0
        %769 = vmatpush.msra.mxu0 0.0
        %770 = vmatpush.msra.mxu0 0.0
        %771 = vmatpush.msra.mxu0 0.0
        %772 = vmatpush.msra.mxu0 0.0
        %773 = vmatpush.msra.mxu0 0.0
        %774 = vmatpush.msra.mxu0 0.0
        %775 = vmatpush.msra.mxu0 0.0
        %776 = vmatpush.msra.mxu0 0.0
        %777 = vmatpush.msra.mxu0 0.0
        %778 = vmatpush.msra.mxu0 0.0
        %779 = vmatpush.msra.mxu0 0.0
        %780 = vmatpush.msra.mxu0 0.0
        %781 = vmatpush.msra.mxu0 0.0
        %782 = vmatpush.msra.mxu0 %v762
        %783 = vmatmul.f32.gmra.mxu0 %v765
        %v784 = vpop.f32.mrf.mxu0
        %v785 = vadd.f32 0.0, %v784
        %786 = vdwg.mxu0
        %787 = vrot.lane.b32.xlu0 %v322, 64
        %v788 = vpop.permute.xlu0 %787
        %v791 = vsel %vm542, %v659, 0
        %793 = vmatpush.msra.mxu0 0.0
        %794 = vmatpush.msra.mxu0 0.0
        %795 = vmatpush.msra.mxu0 0.0
        %796 = vmatpush.msra.mxu0 0.0
        %797 = vmatpush.msra.mxu0 0.0
        %798 = vmatpush.msra.mxu0 0.0
        %799 = vmatpush.msra.mxu0 0.0
        %800 = vmatpush.msra.mxu0 0.0
        %801 = vmatpush.msra.mxu0 0.0
        %802 = vmatpush.msra.mxu0 0.0
        %803 = vmatpush.msra.mxu0 0.0
        %804 = vmatpush.msra.mxu0 0.0
        %805 = vmatpush.msra.mxu0 0.0
        %806 = vmatpush.msra.mxu0 0.0
        %807 = vmatpush.msra.mxu0 0.0
        %808 = vmatpush.msra.mxu0 %v788
        %809 = vmatmul.f32.gmra.mxu0 %v791
        %v810 = vpop.f32.mrf.mxu0
        %v811 = vadd.f32 0.0, %v810
        %812 = vdwg.mxu0
        %813 = vrot.lane.b32.xlu0 %v324, 64
        %v814 = vpop.permute.xlu0 %813
        %v817 = vsel %vm542, %v674, 0
        %819 = vmatpush.msra.mxu0 0.0
        %820 = vmatpush.msra.mxu0 0.0
        %821 = vmatpush.msra.mxu0 0.0
        %822 = vmatpush.msra.mxu0 0.0
        %823 = vmatpush.msra.mxu0 0.0
        %824 = vmatpush.msra.mxu0 0.0
        %825 = vmatpush.msra.mxu0 0.0
        %826 = vmatpush.msra.mxu0 0.0
        %827 = vmatpush.msra.mxu0 0.0
        %828 = vmatpush.msra.mxu0 0.0
        %829 = vmatpush.msra.mxu0 0.0
        %830 = vmatpush.msra.mxu0 0.0
        %831 = vmatpush.msra.mxu0 0.0
        %832 = vmatpush.msra.mxu0 0.0
        %833 = vmatpush.msra.mxu0 0.0
        %834 = vmatpush.msra.mxu0 %v814
        %835 = vmatmul.f32.gmra.mxu0 %v817
        %v836 = vpop.f32.mrf.mxu0
        %v837 = vadd.f32 0.0, %v836
        %838 = vdwg.mxu0
        %839 = vrot.lane.b32.xlu0 %v326, 64
        %v840 = vpop.permute.xlu0 %839
        %v843 = vsel %vm542, %v689, 0
        %845 = vmatpush.msra.mxu0 0.0
        %846 = vmatpush.msra.mxu0 0.0
        %847 = vmatpush.msra.mxu0 0.0
        %848 = vmatpush.msra.mxu0 0.0
        %849 = vmatpush.msra.mxu0 0.0
        %850 = vmatpush.msra.mxu0 0.0
        %851 = vmatpush.msra.mxu0 0.0
        %852 = vmatpush.msra.mxu0 0.0
        %853 = vmatpush.msra.mxu0 0.0
        %854 = vmatpush.msra.mxu0 0.0
        %855 = vmatpush.msra.mxu0 0.0
        %856 = vmatpush.msra.mxu0 0.0
        %857 = vmatpush.msra.mxu0 0.0
        %858 = vmatpush.msra.mxu0 0.0
        %859 = vmatpush.msra.mxu0 0.0
        %860 = vmatpush.msra.mxu0 %v840
        %861 = vmatmul.f32.gmra.mxu0 %v843
        %v862 = vpop.f32.mrf.mxu0
        %v863 = vadd.f32 0.0, %v862
        %864 = vdwg.mxu0
        %865 = vrot.lane.b32.xlu0 %v328, 64
        %v866 = vpop.permute.xlu0 %865
        %v869 = vsel %vm542, %v704, 0
        %871 = vmatpush.msra.mxu0 0.0
        %872 = vmatpush.msra.mxu0 0.0
        %873 = vmatpush.msra.mxu0 0.0
        %874 = vmatpush.msra.mxu0 0.0
        %875 = vmatpush.msra.mxu0 0.0
        %876 = vmatpush.msra.mxu0 0.0
        %877 = vmatpush.msra.mxu0 0.0
        %878 = vmatpush.msra.mxu0 0.0
        %879 = vmatpush.msra.mxu0 0.0
        %880 = vmatpush.msra.mxu0 0.0
        %881 = vmatpush.msra.mxu0 0.0
        %882 = vmatpush.msra.mxu0 0.0
        %883 = vmatpush.msra.mxu0 0.0
        %884 = vmatpush.msra.mxu0 0.0
        %885 = vmatpush.msra.mxu0 0.0
        %886 = vmatpush.msra.mxu0 %v866
        %887 = vmatmul.f32.gmra.mxu0 %v869
        %v888 = vpop.f32.mrf.mxu0
        %v889 = vadd.f32 0.0, %v888
        %890 = vdwg.mxu0
        %891 = vrot.lane.b32.xlu0 %v330, 64
        %v892 = vpop.permute.xlu0 %891
        %v895 = vsel %vm542, %v719, 0
        %897 = vmatpush.msra.mxu0 0.0
        %898 = vmatpush.msra.mxu0 0.0
        %899 = vmatpush.msra.mxu0 0.0
        %900 = vmatpush.msra.mxu0 0.0
        %901 = vmatpush.msra.mxu0 0.0
        %902 = vmatpush.msra.mxu0 0.0
        %903 = vmatpush.msra.mxu0 0.0
        %904 = vmatpush.msra.mxu0 0.0
        %905 = vmatpush.msra.mxu0 0.0
        %906 = vmatpush.msra.mxu0 0.0
        %907 = vmatpush.msra.mxu0 0.0
        %908 = vmatpush.msra.mxu0 0.0
        %909 = vmatpush.msra.mxu0 0.0
        %910 = vmatpush.msra.mxu0 0.0
        %911 = vmatpush.msra.mxu0 0.0
        %912 = vmatpush.msra.mxu0 %v892
        %913 = vmatmul.f32.gmra.mxu0 %v895
        %v914 = vpop.f32.mrf.mxu0
        %v915 = vadd.f32 0.0, %v914
        %916 = vdwg.mxu0
        %917 = vrot.lane.b32.xlu0 %v332, 64
        %v918 = vpop.permute.xlu0 %917
        %v921 = vsel %vm542, %v734, 0
        %923 = vmatpush.msra.mxu0 0.0
        %924 = vmatpush.msra.mxu0 0.0
        %925 = vmatpush.msra.mxu0 0.0
        %926 = vmatpush.msra.mxu0 0.0
        %927 = vmatpush.msra.mxu0 0.0
        %928 = vmatpush.msra.mxu0 0.0
        %929 = vmatpush.msra.mxu0 0.0
        %930 = vmatpush.msra.mxu0 0.0
        %931 = vmatpush.msra.mxu0 0.0
        %932 = vmatpush.msra.mxu0 0.0
        %933 = vmatpush.msra.mxu0 0.0
        %934 = vmatpush.msra.mxu0 0.0
        %935 = vmatpush.msra.mxu0 0.0
        %936 = vmatpush.msra.mxu0 0.0
        %937 = vmatpush.msra.mxu0 0.0
        %938 = vmatpush.msra.mxu0 %v918
        %939 = vmatmul.f32.gmra.mxu0 %v921
        %v940 = vpop.f32.mrf.mxu0
        %v941 = vadd.f32 0.0, %v940
        %942 = vdwg.mxu0
        %943 = vst.msk [vmem:[#allocation3] sm:$0xff] %vm335, %v759
        %945 = vrot.lane.b32.xlu0 %v785, 4
        %v946 = vpop.permute.xlu0 %945
        %vm948 = vcmask 64544
        %949 = vst.msk [vmem:[#allocation3] sm:$0xff] %vm948, %v946
        %951 = vrot.lane.b32.xlu0 %v811, 8
        %v952 = vpop.permute.xlu0 %951
        %vm954 = vcmask 97344
        %955 = vst.msk [vmem:[#allocation3] sm:$0xff] %vm954, %v952
        %957 = vrot.lane.b32.xlu0 %v837, 12
        %v958 = vpop.permute.xlu0 %957
        %vm960 = vcmask 130144
        %961 = vst.msk [vmem:[#allocation3] sm:$0xff] %vm960, %v958
        %963 = vrot.lane.b32.xlu0 %v863, 16
        %v964 = vpop.permute.xlu0 %963
        %vm966 = vcmask 162944
        %967 = vst.msk [vmem:[#allocation3] sm:$0xff] %vm966, %v964
        %969 = vrot.lane.b32.xlu0 %v889, 20
        %v970 = vpop.permute.xlu0 %969
        %vm972 = vcmask 195744
        %973 = vst.msk [vmem:[#allocation3] sm:$0xff] %vm972, %v970
        %975 = vrot.lane.b32.xlu0 %v915, 24
        %v976 = vpop.permute.xlu0 %975
        %vm978 = vcmask 228544
        %979 = vst.msk [vmem:[#allocation3] sm:$0xff] %vm978, %v976
        %981 = vrot.lane.b32.xlu0 %v941, 28
        %v982 = vpop.permute.xlu0 %981
        %vm984 = vcmask 261344
        %985 = vst.msk [vmem:[#allocation3] sm:$0xff] %vm984, %v982
        %v986 = vld [vmem:[#allocation3] sm:$0xff]
        %v987 = vld [vmem:[#allocation9] sm:$0xff]
        %v988 = vld [vmem:[#allocation9 + $0x8] sm:$0xff]
        %v989 = vld [vmem:[#allocation9 + $0x10] sm:$0xff]
        %v990 = vld [vmem:[#allocation9 + $0x18] sm:$0xff]
        %v991 = vld [vmem:[%s3] sm:$0x1]
        %v993 = vperm.slane %v991, 0
        %v996 = vsel %vm291, %v986, 0
        %998 = vmatpush.msra.mxu0 0.0
        %999 = vmatpush.msra.mxu0 0.0
        %1000 = vmatpush.msra.mxu0 0.0
        %1001 = vmatpush.msra.mxu0 0.0
        %1002 = vmatpush.msra.mxu0 0.0
        %1003 = vmatpush.msra.mxu0 0.0
        %1004 = vmatpush.msra.mxu0 0.0
        %1005 = vmatpush.msra.mxu0 0.0
        %1006 = vmatpush.msra.mxu0 0.0
        %1007 = vmatpush.msra.mxu0 0.0
        %1008 = vmatpush.msra.mxu0 0.0
        %1009 = vmatpush.msra.mxu0 0.0
        %1010 = vmatpush.msra.mxu0 %v990
        %1011 = vmatpush.msra.mxu0 %v989
        %1012 = vmatpush.msra.mxu0 %v988
        %1013 = vmatpush.msra.mxu0 %v987
        %1014 = vmatmul.f32.gmra.mxu0 %v996
        %v1015 = vpop.f32.mrf.mxu0
        %v1016 = vadd.f32 %v993, %v1015
        %1017 = vdwg.mxu0
        %1018 = vst.msk [vmem:[%s278] sm:$0xff] %vm291, %v1016
        %v1019 = vrot.slane %v659, 4
        %vm1020 = vcmask 1047556
        %v1021 = vsel %vm1020, %v1019, %v629
        %v1022 = vrot.slane %v629, 4
        %v1023 = vsel %vm1020, %v659, %v1022
        %v1025 = vunpack.c.l.s4 1983009808
        %v1026 = vunpack.c.0.s8 %v1025
        %v1027 = vperm.slane %v1021, %v1026
        %v1029 = vunpack.c.l.s4 1983009808
        %v1030 = vunpack.c.0.s8 %v1029
        %v1031 = vperm.slane %v1023, %v1030
        %v1032 = vrot.slane %v674, 4
        %v1033 = vsel %vm1020, %v1032, %v644
        %v1034 = vrot.slane %v644, 4
        %v1035 = vsel %vm1020, %v674, %v1034
        %v1037 = vunpack.c.l.s4 1983009808
        %v1038 = vunpack.c.0.s8 %v1037
        %v1039 = vperm.slane %v1033, %v1038
        %v1041 = vunpack.c.l.s4 1983009808
        %v1042 = vunpack.c.0.s8 %v1041
        %v1043 = vperm.slane %v1035, %v1042
        %v1044 = vrot.slane %v719, 4
        %v1045 = vsel %vm1020, %v1044, %v689
        %v1046 = vrot.slane %v689, 4
        %v1047 = vsel %vm1020, %v719, %v1046
        %v1049 = vunpack.c.l.s4 1983009808
        %v1050 = vunpack.c.0.s8 %v1049
        %v1051 = vperm.slane %v1045, %v1050
        %v1053 = vunpack.c.l.s4 1983009808
        %v1054 = vunpack.c.0.s8 %v1053
        %v1055 = vperm.slane %v1047, %v1054
        %v1056 = vrot.slane %v734, 4
        %v1057 = vsel %vm1020, %v1056, %v704
        %v1058 = vrot.slane %v704, 4
        %v1059 = vsel %vm1020, %v734, %v1058
        %v1061 = vunpack.c.l.s4 1983009808
        %v1062 = vunpack.c.0.s8 %v1061
        %v1063 = vperm.slane %v1057, %v1062
        %v1065 = vunpack.c.l.s4 1983009808
        %v1066 = vunpack.c.0.s8 %v1065
        %v1067 = vperm.slane %v1059, %v1066
        %v1068 = vrot.slane %v1039, 4
        %v1069 = vsel %vm1020, %v1068, %v1027
        %v1070 = vrot.slane %v1027, 4
        %v1071 = vsel %vm1020, %v1039, %v1070
        %v1073 = vunpack.c.l.s4 1934713408
        %v1074 = vunpack.c.0.s8 %v1073
        %v1075 = vperm.slane %v1069, %v1074
        %v1077 = vunpack.c.l.s4 1934713408
        %v1078 = vunpack.c.0.s8 %v1077
        %v1079 = vperm.slane %v1071, %v1078
        %v1080 = vrot.slane %v1043, 4
        %v1081 = vsel %vm1020, %v1080, %v1031
        %v1082 = vrot.slane %v1031, 4
        %v1083 = vsel %vm1020, %v1043, %v1082
        %v1085 = vunpack.c.l.s4 1934713408
        %v1086 = vunpack.c.0.s8 %v1085
        %v1087 = vperm.slane %v1081, %v1086
        %v1089 = vunpack.c.l.s4 1934713408
        %v1090 = vunpack.c.0.s8 %v1089
        %v1091 = vperm.slane %v1083, %v1090
        %v1092 = vrot.slane %v1063, 4
        %v1093 = vsel %vm1020, %v1092, %v1051
        %v1094 = vrot.slane %v1051, 4
        %v1095 = vsel %vm1020, %v1063, %v1094
        %v1097 = vunpack.c.l.s4 1934713408
        %v1098 = vunpack.c.0.s8 %v1097
        %v1099 = vperm.slane %v1093, %v1098
        %v1101 = vunpack.c.l.s4 1934713408
        %v1102 = vunpack.c.0.s8 %v1101
        %v1103 = vperm.slane %v1095, %v1102
        %v1104 = vrot.slane %v1067, 4
        %v1105 = vsel %vm1020, %v1104, %v1055
        %v1106 = vrot.slane %v1055, 4
        %v1107 = vsel %vm1020, %v1067, %v1106
        %v1109 = vunpack.c.l.s4 1934713408
        %v1110 = vunpack.c.0.s8 %v1109
        %v1111 = vperm.slane %v1105, %v1110
        %v1113 = vunpack.c.l.s4 1934713408
        %v1114 = vunpack.c.0.s8 %v1113
        %v1115 = vperm.slane %v1107, %v1114
        %v1116 = vrot.slane %v1099, 4
        %v1117 = vsel %vm1020, %v1116, %v1075
        %v1118 = vrot.slane %v1075, 4
        %v1119 = vsel %vm1020, %v1099, %v1118
        %v1120 = vrot.slane %v1103, 4
        %v1121 = vsel %vm1020, %v1120, %v1079
        %v1122 = vrot.slane %v1079, 4
        %v1123 = vsel %vm1020, %v1103, %v1122
        %v1124 = vrot.slane %v1111, 4
        %v1125 = vsel %vm1020, %v1124, %v1087
        %v1126 = vrot.slane %v1087, 4
        %v1127 = vsel %vm1020, %v1111, %v1126
        %v1128 = vrot.slane %v1115, 4
        %v1129 = vsel %vm1020, %v1128, %v1091
        %v1130 = vrot.slane %v1091, 4
        %v1131 = vsel %vm1020, %v1115, %v1130
        %1133 = vrot.lane.b32.xlu0 %v1119, 8
        %v1134 = vpop.permute.xlu0 %1133
        %1137 = vrot.lane.b32.xlu0 %v1121, 16
        %v1138 = vpop.permute.xlu0 %1137
        %1141 = vrot.lane.b32.xlu0 %v1123, 24
        %v1142 = vpop.permute.xlu0 %1141
        %1145 = vrot.lane.b32.xlu0 %v1125, 32
        %v1146 = vpop.permute.xlu0 %1145
        %1149 = vrot.lane.b32.xlu0 %v1127, 40
        %v1150 = vpop.permute.xlu0 %1149
        %1153 = vrot.lane.b32.xlu0 %v1129, 48
        %v1154 = vpop.permute.xlu0 %1153
        %1157 = vrot.lane.b32.xlu0 %v1131, 56
        %v1158 = vpop.permute.xlu0 %1157
        %v1160 = vsel %vm542, %v1117, %v1134
        %vm1161 = vcmask 130048
        %v1162 = vsel %vm1161, %v1160, %v1138
        %vm1163 = vcmask 195584
        %v1164 = vsel %vm1163, %v1162, %v1142
        %v1165 = vsel %vm291, %v1164, %v1146
        %vm1166 = vcmask 326656
        %v1167 = vsel %vm1166, %v1165, %v1150
        %vm1168 = vcmask 392192
        %v1169 = vsel %vm1168, %v1167, %v1154
        %vm1170 = vcmask 457728
        %v1171 = vsel %vm1170, %v1169, %v1158
        %vm1172 = vcmask 523264
        %1173 = vst.msk [vmem:[%s285] sm:$0xff] %vm1172, %v1171
        %s1174 = sand.u32 %s124, 1
        %s1175 = scalar_lea.sflag [#allocation6], %s1174
        %s1176 = sand.u32 %s124, 1
        %s1177 = smul.addr %s1176, 8
        %s1178 = scalar_lea.vmem [#allocation10], %s1177
        %s1179 = sand.u32 %s150, 1
        %s1180 = scalar_lea.sflag [#allocation12], %s1179
        %s1181 = sand.u32 %s150, 1
        %s1182 = smul.addr %s1181, 8
        %s1183 = scalar_lea.vmem [#allocation11], %s1182
        // Predicated region
        $region49: #{tpu_custom_call.1} parent=35 // pred_check
          %p1184 = pneg %p134
        $region50: #{tpu_custom_call.1} parent=35 // pred_check_branch
          %1186 = sbr.rel (%p1184) target = $region52
        $region51: #{tpu_custom_call.1} parent=35 // pred_region
          %1188 = vsyncadd %s1175, 0
          %s1189 = smul.addr %s27, 8
          %s1190 = scalar_lea.hbm %s4, %s1189
          %s1192 = sshll.u32 %s1178, 4
          %s1193 = int_to_ptr.vmem [resolvable:$true] %s1192
          %s1194 = sshll.u32 %s1190, 4
          %s1195 = int_to_ptr.hbm [resolvable:$true] %s1194
          %1197 = dma.vmem_to_hbm [thread:$0]  %s1193, 128, %s1195, %s1175
        $region52: #{tpu_custom_call.1} parent=35 // pred_fallthru
          _
        // Predicated region
        $region53: #{tpu_custom_call.1} parent=35 // pred_check
          %p1198 = pneg %p160
        $region54: #{tpu_custom_call.1} parent=35 // pred_check_branch
          %1200 = sbr.rel (%p1198) target = $region56
        $region55: #{tpu_custom_call.1} parent=35 // pred_region
          %1202 = vsyncadd %s1180, 0
          %s1203 = smul.addr %s27, 8
          %s1204 = scalar_lea.hbm %s5, %s1203
          %s1206 = sshll.u32 %s1183, 4
          %s1207 = int_to_ptr.vmem [resolvable:$true] %s1206
          %s1208 = sshll.u32 %s1204, 4
          %s1209 = int_to_ptr.hbm [resolvable:$true] %s1208
          %1211 = dma.vmem_to_hbm [thread:$0]  %s1207, 128, %s1209, %s1180
        $region56: #{tpu_custom_call.1} parent=35 // pred_fallthru
          _
      $region36: #{tpu_custom_call.1} parent=5 // pred_fallthru
        _
      %p1212 = scmp.le.s32.totalorder 2, %s22
      // Predicated region
      $region57: #{tpu_custom_call.1} parent=5 // pred_check
        %p1213 = pneg %p1212
      $region58: #{tpu_custom_call.1} parent=5 // pred_check_branch
        %1215 = sbr.rel (%p1213) target = $region60
      $region59: #{tpu_custom_call.1} parent=5 // pred_region
        %s1216 = ssub.s32 %s22, 2
        // Predicated region
        $region61: #{tpu_custom_call.1} parent=59 // pred_check
          %p1217 = pneg %p140
        $region62: #{tpu_custom_call.1} parent=59 // pred_check_branch
          %1219 = sbr.rel (%p1217) target = $region64
        $region63: #{tpu_custom_call.1} parent=59 // pred_region
          %s1220 = sand.u32 %s125, 1
          %s1221 = scalar_lea.sflag [#allocation6], %s1220
          %s1222 = sand.u32 %s125, 1
          %s1223 = smul.addr %s1222, 8
          %s1224 = scalar_lea.vmem [#allocation10], %s1223
          %1226 = dma.done %s1221, 128
        $region64: #{tpu_custom_call.1} parent=59 // pred_fallthru
          _
        // Predicated region
        $region65: #{tpu_custom_call.1} parent=59 // pred_check
          %p1227 = pneg %p166
        $region66: #{tpu_custom_call.1} parent=59 // pred_check_branch
          %1229 = sbr.rel (%p1227) target = $region68
        $region67: #{tpu_custom_call.1} parent=59 // pred_region
          %s1230 = sand.u32 %s151, 1
          %s1231 = scalar_lea.sflag [#allocation12], %s1230
          %s1232 = sand.u32 %s151, 1
          %s1233 = smul.addr %s1232, 8
          %s1234 = scalar_lea.vmem [#allocation11], %s1233
          %1236 = dma.done %s1231, 128
        $region68: #{tpu_custom_call.1} parent=59 // pred_fallthru
          _
      $region60: #{tpu_custom_call.1} parent=5 // pred_fallthru
        _
    $region6: #{tpu_custom_call.1} parent=1 // loop_footer
      %s26 = sadd.s32 1, %s22
    $region7: #{tpu_custom_call.1} parent=1 // loop_footer_branch
      %21 = sbr.rel target = $region3
    $region8: #{tpu_custom_call.1} parent=1 // loop_exit
      _
    %1237 = vsyncpa [#allocation5], 1
    %s1238 = scalar_lea.sflag [#allocation5], 1
    %1239 = vsyncpa %s1238, 1
    %1240 = vsyncpa [#allocation8], 1
    %1241 = vsyncpa [#allocation6], 1
    %s1242 = scalar_lea.sflag [#allocation6], 1
    %1243 = vsyncpa %s1242, 1
    %1244 = vsyncpa [#allocation12], 1
    %s1245 = scalar_lea.sflag [#allocation12], 1
    %1246 = vsyncpa %s1245, 1

</llo_original>
